<compile_context>
chip_gen: v5e
topology: v5e:2x2
jax: 0.10.0
libtpu: 0.0.40
codegen_flags: <defaults>
</compile_context>

<pallas_src>
import functools

import jax
import jax.numpy as jnp
from jax.experimental import pallas as pl
from jax.experimental.pallas import tpu as pltpu


def _round_up(n, m):
    return ((n + m - 1) // m) * m


# ----------------------------- Pallas kernels ------------------------------

def _conv_relu_pool_kernel(xe_ref, xo_ref, ws_ref, b_ref, o_ref, *, kk, ph, npad):
    """Fused KxK valid conv + bias + ReLU + 2x2/stride-2 max-pool for ONE image.

    xe_ref / xo_ref : (1, H//2, WCpad)   even / odd input rows; lane j*C + c = pixel (col j, chan c)
    ws_ref          : (kk, WCpad, 2*npad) structured conv weight; the two N-halves are the two
                                          column pool-quadrants (qj = 0, 1); lane pj*OC + oc inside
    b_ref           : (1, npad)           bias replicated over pooled columns (pj, oc)
    o_ref           : (1, ph, npad)       pooled output rows; lane pj*OC + oc (zero beyond PW*OC)
    """
    planes = (xe_ref, xo_ref)
    m = None
    for qi in range(2):                              # row pool-quadrant
        acc = None
        for di in range(kk):                         # kernel row, accumulated on the MXU
            rr = qi + di                             # input-row offset of pooled row 0
            lhs = planes[rr % 2][0, rr // 2: rr // 2 + ph, :]      # (ph, WCpad)
            d = jnp.dot(lhs, ws_ref[di], preferred_element_type=jnp.float32)
            acc = d if acc is None else acc + d
        cand = jnp.maximum(acc[:, :npad], acc[:, npad:])           # column pool (qj max)
        m = cand if m is None else jnp.maximum(m, cand)            # row pool   (qi max)
    # bias + ReLU once, after the 4-way max (exact: bias shared, ReLU monotone)
    o_ref[0] = jnp.maximum(m + b_ref[...], 0.0)


def _mlp_kernel(x_ref, w1_ref, b1_ref, w2_ref, b2_ref, w3_ref, b3_ref, o_ref):
    h = jnp.dot(x_ref[...], w1_ref[...], preferred_element_type=jnp.float32)
    h = jnp.maximum(h + b1_ref[...], 0.0)
    h = jnp.dot(h, w2_ref[...], preferred_element_type=jnp.float32)
    h = jnp.maximum(h + b2_ref[...], 0.0)
    h = jnp.dot(h, w3_ref[...], preferred_element_type=jnp.float32)
    o_ref[...] = (h + b3_ref[...]).astype(o_ref.dtype)


# ------------------------------ layer wrappers ------------------------------

def _structured_conv_weight(w, width, pw, k, wcpad, npad):
    """w: (OC, C, K, K) PyTorch Conv2d weight -> (K, wcpad, 2*npad) block-Toeplitz matrix.

    For an input row vector x2 with x2[j*C + c] = x[row, j, c]:
      (x2 @ out[di])[qj*npad + pj*OC + oc] = sum_{dj,c} x[row, 2*pj + qj + dj, c] * w[oc, c, di, dj]
    i.e. the di-row contribution to conv output column 2*pj + qj.
    """
    oc_, c_ = w.shape[0], w.shape[1]
    w_t = jnp.transpose(w, (2, 3, 1, 0))                     # (kh, kw, c, oc)
    j = jnp.arange(width)[None, :, None]                     # input column
    pj = jnp.arange(pw)[None, None, :]                       # pooled output column
    qj = jnp.arange(2)[:, None, None]                        # column pool-quadrant
    dj = j - 2 * pj - qj                                     # kernel column pairing (j, pj, qj)
    valid = (dj >= 0) & (dj < k)
    dj_c = jnp.clip(dj, 0, k - 1)
    ws = w_t[:, dj_c, :, :]                                  # (kh, 2, width, pw, c, oc)
    ws = ws * valid[None, :, :, :, None, None].astype(w.dtype)
    ws = jnp.transpose(ws, (1, 0, 2, 4, 3, 5))               # (qj, kh, j, c, pj, oc)
    ws = ws.reshape(2, k, width * c_, pw * oc_)
    ws = jnp.pad(ws, ((0, 0), (0, 0), (0, wcpad - width * c_), (0, npad - pw * oc_)))
    return jnp.concatenate([ws[0], ws[1]], axis=-1)          # (kh, wcpad, 2*npad)


def _conv_relu_pool(xe, xo, ws, bias, k, ph, npad):
    """xe/xo: (B, H//2, wcpad); ws: (k, wcpad, 2*npad); bias: (1, npad) -> (B, ph, npad)."""
    B, hh, wcpad = xe.shape
    kernel = functools.partial(_conv_relu_pool_kernel, kk=k, ph=ph, npad=npad)
    cost = pl.CostEstimate(
        flops=B * 2 * k * 2 * ph * wcpad * (2 * npad),
        transcendentals=0,
        bytes_accessed=4 * (2 * B * hh * wcpad + k * wcpad * 2 * npad + npad + B * ph * npad),
    )
    return pl.pallas_call(
        kernel,
        out_shape=jax.ShapeDtypeStruct((B, ph, npad), jnp.float32),
        grid=(B,),
        in_specs=[
            pl.BlockSpec((1, hh, wcpad), lambda i: (i, 0, 0)),          # even rows (per image)
            pl.BlockSpec((1, hh, wcpad), lambda i: (i, 0, 0)),          # odd rows  (per image)
            pl.BlockSpec((k, wcpad, 2 * npad), lambda i: (0, 0, 0)),    # weights: VMEM-resident
            pl.BlockSpec((1, npad), lambda i: (0, 0)),                  # bias:    VMEM-resident
        ],
        out_specs=pl.BlockSpec((1, ph, npad), lambda i: (i, 0, 0)),
        compiler_params=pltpu.CompilerParams(dimension_semantics=("parallel",)),
        cost_estimate=cost,
    )(xe, xo, ws, bias)


def _mlp(x, w1, b1, w2, b2, w3, b3):
    """x: (B_pad, K1); all feature dims multiples of 128; B_pad a multiple of the batch tile."""
    B, k1 = x.shape
    n1, n2, n3 = w1.shape[1], w2.shape[1], w3.shape[1]
    tb = 128 if (B > 128 and B % 128 == 0) else B
    assert B % tb == 0
    cost = pl.CostEstimate(
        flops=2 * B * (k1 * n1 + n1 * n2 + n2 * n3),
        transcendentals=0,
        bytes_accessed=4 * (B * k1 + k1 * n1 + n1 * n2 + n2 * n3 + n1 + n2 + n3 + B * n3),
    )
    return pl.pallas_call(
        _mlp_kernel,
        out_shape=jax.ShapeDtypeStruct((B, n3), jnp.float32),
        grid=(B // tb,),
        in_specs=[
            pl.BlockSpec((tb, k1), lambda i: (i, 0)),
            pl.BlockSpec((k1, n1), lambda i: (0, 0)),
            pl.BlockSpec((1, n1), lambda i: (0, 0)),
            pl.BlockSpec((n1, n2), lambda i: (0, 0)),
            pl.BlockSpec((1, n2), lambda i: (0, 0)),
            pl.BlockSpec((n2, n3), lambda i: (0, 0)),
            pl.BlockSpec((1, n3), lambda i: (0, 0)),
        ],
        out_specs=pl.BlockSpec((tb, n3), lambda i: (i, 0)),
        compiler_params=pltpu.CompilerParams(dimension_semantics=("parallel",)),
        cost_estimate=cost,
    )(x, w1, b1, w2, b2, w3, b3)


# ------------------------------- full model ---------------------------------

def init_params(key, in_channels, base_dim, num_classes):
    ks = jax.random.split(key, 10)

    def u(k, shape, fan_in):
        bound = 1.0 / jnp.sqrt(fan_in)
        return jax.random.uniform(k, shape, jnp.float32, -bound, bound)

    p = {}
    p["conv1_w"] = u(ks[0], (base_dim, in_channels, 5, 5), in_channels * 25)
    p["conv1_b"] = u(ks[1], (base_dim,), in_channels * 25)
    p["conv2_w"] = u(ks[2], (base_dim * 2, base_dim, 5, 5), base_dim * 25)
    p["conv2_b"] = u(ks[3], (base_dim * 2,), base_dim * 25)
    fc1_in = base_dim * 2 * 5 * 5
    p["fc1_w"] = u(ks[4], (120, fc1_in), fc1_in)
    p["fc1_b"] = u(ks[5], (120,), fc1_in)
    p["fc2_w"] = u(ks[6], (84, 120), 120)
    p["fc2_b"] = u(ks[7], (84,), 120)
    p["fc3_w"] = u(ks[8], (num_classes, 84), 84)
    p["fc3_b"] = u(ks[9], (num_classes,), 84)
    return p


def classic_model_forward(params, x):
    """x: (B, in_channels, 32, 32) NCHW float32 -> (B, num_classes) logits."""
    B, C1, H1, W1 = x.shape
    base_dim = params["conv1_w"].shape[0]
    num_classes = params["fc3_w"].shape[0]
    K = params["conv1_w"].shape[2]

    OH1, OW1 = H1 - K + 1, W1 - K + 1
    PH1, PW1 = OH1 // 2, OW1 // 2
    OC1 = base_dim
    H2, W2, C2 = PH1, PW1, OC1
    OH2, OW2 = H2 - K + 1, W2 - K + 1
    PH2, PW2 = OH2 // 2, OW2 // 2
    OC2 = base_dim * 2
    assert OH1 % 2 == 0 and OW1 % 2 == 0 and OH2 % 2 == 0 and OW2 % 2 == 0
    assert H1 % 2 == 0 and H2 % 2 == 0

    wc1 = _round_up(W1 * C1, 128)
    np1 = _round_up(PW1 * OC1, 128)           # == conv2's padded W*C lane count
    np2 = _round_up(PW2 * OC2, 128)

    # ---- conv1: NCHW -> NHWC once, lanes = (column, channel), rows split even/odd ----
    x2 = x.transpose(0, 2, 3, 1).reshape(B, H1, W1 * C1)
    x2 = jnp.pad(x2, ((0, 0), (0, 0), (0, wc1 - W1 * C1)))
    ws1 = _structured_conv_weight(params["conv1_w"], W1, PW1, K, wc1, np1)
    cb1 = jnp.pad(jnp.tile(params["conv1_b"], PW1), (0, np1 - PW1 * OC1)).reshape(1, -1)
    a1 = _conv_relu_pool(x2[:, 0::2, :], x2[:, 1::2, :], ws1, cb1, K, PH1, np1)

    # ---- conv2: a1's lane layout (pj*OC1 + oc) is exactly conv2's (j*C2 + c) ----
    ws2 = _structured_conv_weight(params["conv2_w"], W2, PW2, K, np1, np2)
    cb2 = jnp.pad(jnp.tile(params["conv2_b"], PW2), (0, np2 - PW2 * OC2)).reshape(1, -1)
    a2 = _conv_relu_pool(a1[:, 0::2, :], a1[:, 1::2, :], ws2, cb2, K, PH2, np2)

    # ---- MLP: flatten is a free contiguous reshape (already lane-padded to np2) ----
    k1 = PH2 * np2
    xf = a2.reshape(B, k1)
    n1 = _round_up(params["fc1_w"].shape[0], 128)
    n2 = _round_up(params["fc2_w"].shape[0], 128)
    n3 = _round_up(num_classes, 128)

    # fc1 rows permuted to the (h, w*OC2 + c) conv2 output layout, zero rows on padded lanes
    fc1 = params["fc1_w"].reshape(-1, OC2, PH2, PW2).transpose(2, 3, 1, 0)   # (h, w, c, out)
    fc1 = fc1.reshape(PH2, PW2 * OC2, -1)
    fc1 = jnp.pad(fc1, ((0, 0), (0, np2 - PW2 * OC2), (0, n1 - fc1.shape[-1])))
    w1 = fc1.reshape(k1, n1)
    fb1 = jnp.pad(params["fc1_b"], (0, n1 - params["fc1_b"].shape[0])).reshape(1, -1)
    w2 = jnp.pad(params["fc2_w"].T, ((0, n1 - params["fc2_w"].shape[1]),
                                     (0, n2 - params["fc2_w"].shape[0])))
    fb2 = jnp.pad(params["fc2_b"], (0, n2 - params["fc2_b"].shape[0])).reshape(1, -1)
    w3 = jnp.pad(params["fc3_w"].T, ((0, n2 - params["fc3_w"].shape[1]),
                                     (0, n3 - num_classes)))
    fb3 = jnp.pad(params["fc3_b"], (0, n3 - num_classes)).reshape(1, -1)

    bp = _round_up(B, 8) if B <= 128 else _round_up(B, 128)
    if bp != B:
        xf = jnp.pad(xf, ((0, bp - B), (0, 0)))

    out = _mlp(xf, w1, fb1, w2, fb2, w3, fb3)
    return out[:B, :num_classes]


if __name__ == "__main__":
    in_channels, base_dim, num_classes = 3, 4, 10
    batch = 2
    key = jax.random.PRNGKey(0)
    k_params, k_x = jax.random.split(key)
    params = init_params(k_params, in_channels, base_dim, num_classes)
    # spatial 32x32 is implied by fc1's base_dim*2*5*5 input size
    x = jax.random.normal(k_x, (batch, in_channels, 32, 32), jnp.float32)

    out = jax.jit(classic_model_forward)(params, x)
    out = jax.block_until_ready(out)
    assert out.shape == (batch, num_classes), out.shape
    print("KERNEL_OK")
</pallas_src>

<mosaic_0001>
module attributes {stable_mosaic.version = 11 : i64} {
  func.func @_conv_relu_pool_kernel(%arg0: i32, %arg1: memref<1x16x128xf32, #tpu.memory_space<vmem>>, %arg2: memref<1x16x128xf32, #tpu.memory_space<vmem>>, %arg3: memref<5x128x256xf32, #tpu.memory_space<vmem>>, %arg4: memref<1x128xf32, #tpu.memory_space<vmem>>, %arg5: memref<1x14x128xf32, #tpu.memory_space<vmem>>) attributes {dimension_semantics = [#tpu.dimension_semantics<parallel>], iteration_bounds = array<i64: 2>, scalar_prefetch = 0 : i64, scratch_operands = 0 : i64, tpu.core_type = #tpu.core_type<tc>, window_params = [{transform_indices = @transform_0, window_bounds = array<i64: 1, 16, 128>}, {transform_indices = @transform_1, window_bounds = array<i64: 1, 16, 128>}, {pipeline_mode = #tpu.pipeline_mode<synchronous>, transform_indices = @transform_2, window_bounds = array<i64: 5, 128, 256>}, {pipeline_mode = #tpu.pipeline_mode<synchronous>, transform_indices = @transform_3, window_bounds = array<i64: 1, 128>}, {transform_indices = @transform_4, window_bounds = array<i64: 1, 14, 128>}]} {
    %c0 = arith.constant 0 : index
    %c0_0 = arith.constant 0 : index
    %c0_1 = arith.constant 0 : index
    %0 = vector.load %arg1[%c0, %c0_0, %c0_1] : memref<1x16x128xf32, #tpu.memory_space<vmem>>, vector<1x14x128xf32>
    %1 = vector.shape_cast %0 : vector<1x14x128xf32> to vector<14x128xf32>
    %c0_2 = arith.constant 0 : index
    %c0_3 = arith.constant 0 : index
    %c0_4 = arith.constant 0 : index
    %2 = vector.load %arg3[%c0_2, %c0_3, %c0_4] : memref<5x128x256xf32, #tpu.memory_space<vmem>>, vector<1x128x256xf32>
    %3 = vector.shape_cast %2 : vector<1x128x256xf32> to vector<128x256xf32>
    %cst = arith.constant dense<0.000000e+00> : vector<14x256xf32>
    %4 = tpu.matmul %1, %3, %cst {dimension_numbers = #tpu.dot_dimension_numbers<[1], [0], [0], [1], [0, 0, 1, 1], [], []>} : vector<14x128xf32>, vector<128x256xf32>, vector<14x256xf32> -> vector<14x256xf32>
    %c0_5 = arith.constant 0 : index
    %c0_6 = arith.constant 0 : index
    %c0_7 = arith.constant 0 : index
    %5 = vector.load %arg2[%c0_5, %c0_6, %c0_7] : memref<1x16x128xf32, #tpu.memory_space<vmem>>, vector<1x14x128xf32>
    %6 = vector.shape_cast %5 : vector<1x14x128xf32> to vector<14x128xf32>
    %c1 = arith.constant 1 : index
    %c0_8 = arith.constant 0 : index
    %c0_9 = arith.constant 0 : index
    %7 = vector.load %arg3[%c1, %c0_8, %c0_9] : memref<5x128x256xf32, #tpu.memory_space<vmem>>, vector<1x128x256xf32>
    %8 = vector.shape_cast %7 : vector<1x128x256xf32> to vector<128x256xf32>
    %cst_10 = arith.constant dense<0.000000e+00> : vector<14x256xf32>
    %9 = tpu.matmul %6, %8, %cst_10 {dimension_numbers = #tpu.dot_dimension_numbers<[1], [0], [0], [1], [0, 0, 1, 1], [], []>} : vector<14x128xf32>, vector<128x256xf32>, vector<14x256xf32> -> vector<14x256xf32>
    %10 = arith.addf %4, %9 : vector<14x256xf32>
    %c0_11 = arith.constant 0 : index
    %c1_12 = arith.constant 1 : index
    %c0_13 = arith.constant 0 : index
    %11 = vector.load %arg1[%c0_11, %c1_12, %c0_13] : memref<1x16x128xf32, #tpu.memory_space<vmem>>, vector<1x14x128xf32>
    %12 = vector.shape_cast %11 : vector<1x14x128xf32> to vector<14x128xf32>
    %c2 = arith.constant 2 : index
    %c0_14 = arith.constant 0 : index
    %c0_15 = arith.constant 0 : index
    %13 = vector.load %arg3[%c2, %c0_14, %c0_15] : memref<5x128x256xf32, #tpu.memory_space<vmem>>, vector<1x128x256xf32>
    %14 = vector.shape_cast %13 : vector<1x128x256xf32> to vector<128x256xf32>
    %cst_16 = arith.constant dense<0.000000e+00> : vector<14x256xf32>
    %15 = tpu.matmul %12, %14, %cst_16 {dimension_numbers = #tpu.dot_dimension_numbers<[1], [0], [0], [1], [0, 0, 1, 1], [], []>} : vector<14x128xf32>, vector<128x256xf32>, vector<14x256xf32> -> vector<14x256xf32>
    %16 = arith.addf %10, %15 : vector<14x256xf32>
    %c0_17 = arith.constant 0 : index
    %c1_18 = arith.constant 1 : index
    %c0_19 = arith.constant 0 : index
    %17 = vector.load %arg2[%c0_17, %c1_18, %c0_19] : memref<1x16x128xf32, #tpu.memory_space<vmem>>, vector<1x14x128xf32>
    %18 = vector.shape_cast %17 : vector<1x14x128xf32> to vector<14x128xf32>
    %c3 = arith.constant 3 : index
    %c0_20 = arith.constant 0 : index
    %c0_21 = arith.constant 0 : index
    %19 = vector.load %arg3[%c3, %c0_20, %c0_21] : memref<5x128x256xf32, #tpu.memory_space<vmem>>, vector<1x128x256xf32>
    %20 = vector.shape_cast %19 : vector<1x128x256xf32> to vector<128x256xf32>
    %cst_22 = arith.constant dense<0.000000e+00> : vector<14x256xf32>
    %21 = tpu.matmul %18, %20, %cst_22 {dimension_numbers = #tpu.dot_dimension_numbers<[1], [0], [0], [1], [0, 0, 1, 1], [], []>} : vector<14x128xf32>, vector<128x256xf32>, vector<14x256xf32> -> vector<14x256xf32>
    %22 = arith.addf %16, %21 : vector<14x256xf32>
    %c0_23 = arith.constant 0 : index
    %c2_24 = arith.constant 2 : index
    %c0_25 = arith.constant 0 : index
    %23 = vector.load %arg1[%c0_23, %c2_24, %c0_25] : memref<1x16x128xf32, #tpu.memory_space<vmem>>, vector<1x14x128xf32>
    %24 = vector.shape_cast %23 : vector<1x14x128xf32> to vector<14x128xf32>
    %c4 = arith.constant 4 : index
    %c0_26 = arith.constant 0 : index
    %c0_27 = arith.constant 0 : index
    %25 = vector.load %arg3[%c4, %c0_26, %c0_27] : memref<5x128x256xf32, #tpu.memory_space<vmem>>, vector<1x128x256xf32>
    %26 = vector.shape_cast %25 : vector<1x128x256xf32> to vector<128x256xf32>
    %cst_28 = arith.constant dense<0.000000e+00> : vector<14x256xf32>
    %27 = tpu.matmul %24, %26, %cst_28 {dimension_numbers = #tpu.dot_dimension_numbers<[1], [0], [0], [1], [0, 0, 1, 1], [], []>} : vector<14x128xf32>, vector<128x256xf32>, vector<14x256xf32> -> vector<14x256xf32>
    %28 = arith.addf %22, %27 : vector<14x256xf32>
    %29 = vector.extract_strided_slice %28 {offsets = [0, 0], sizes = [14, 128], strides = [1, 1]} : vector<14x256xf32> to vector<14x128xf32>
    %30 = vector.extract_strided_slice %28 {offsets = [0, 128], sizes = [14, 128], strides = [1, 1]} : vector<14x256xf32> to vector<14x128xf32>
    %31 = arith.maximumf %29, %30 : vector<14x128xf32>
    %c0_29 = arith.constant 0 : index
    %c0_30 = arith.constant 0 : index
    %c0_31 = arith.constant 0 : index
    %32 = vector.load %arg2[%c0_29, %c0_30, %c0_31] : memref<1x16x128xf32, #tpu.memory_space<vmem>>, vector<1x14x128xf32>
    %33 = vector.shape_cast %32 : vector<1x14x128xf32> to vector<14x128xf32>
    %c0_32 = arith.constant 0 : index
    %c0_33 = arith.constant 0 : index
    %c0_34 = arith.constant 0 : index
    %34 = vector.load %arg3[%c0_32, %c0_33, %c0_34] : memref<5x128x256xf32, #tpu.memory_space<vmem>>, vector<1x128x256xf32>
    %35 = vector.shape_cast %34 : vector<1x128x256xf32> to vector<128x256xf32>
    %cst_35 = arith.constant dense<0.000000e+00> : vector<14x256xf32>
    %36 = tpu.matmul %33, %35, %cst_35 {dimension_numbers = #tpu.dot_dimension_numbers<[1], [0], [0], [1], [0, 0, 1, 1], [], []>} : vector<14x128xf32>, vector<128x256xf32>, vector<14x256xf32> -> vector<14x256xf32>
    %c0_36 = arith.constant 0 : index
    %c1_37 = arith.constant 1 : index
    %c0_38 = arith.constant 0 : index
    %37 = vector.load %arg1[%c0_36, %c1_37, %c0_38] : memref<1x16x128xf32, #tpu.memory_space<vmem>>, vector<1x14x128xf32>
    %38 = vector.shape_cast %37 : vector<1x14x128xf32> to vector<14x128xf32>
    %c1_39 = arith.constant 1 : index
    %c0_40 = arith.constant 0 : index
    %c0_41 = arith.constant 0 : index
    %39 = vector.load %arg3[%c1_39, %c0_40, %c0_41] : memref<5x128x256xf32, #tpu.memory_space<vmem>>, vector<1x128x256xf32>
    %40 = vector.shape_cast %39 : vector<1x128x256xf32> to vector<128x256xf32>
    %cst_42 = arith.constant dense<0.000000e+00> : vector<14x256xf32>
    %41 = tpu.matmul %38, %40, %cst_42 {dimension_numbers = #tpu.dot_dimension_numbers<[1], [0], [0], [1], [0, 0, 1, 1], [], []>} : vector<14x128xf32>, vector<128x256xf32>, vector<14x256xf32> -> vector<14x256xf32>
    %42 = arith.addf %36, %41 : vector<14x256xf32>
    %c0_43 = arith.constant 0 : index
    %c1_44 = arith.constant 1 : index
    %c0_45 = arith.constant 0 : index
    %43 = vector.load %arg2[%c0_43, %c1_44, %c0_45] : memref<1x16x128xf32, #tpu.memory_space<vmem>>, vector<1x14x128xf32>
    %44 = vector.shape_cast %43 : vector<1x14x128xf32> to vector<14x128xf32>
    %c2_46 = arith.constant 2 : index
    %c0_47 = arith.constant 0 : index
    %c0_48 = arith.constant 0 : index
    %45 = vector.load %arg3[%c2_46, %c0_47, %c0_48] : memref<5x128x256xf32, #tpu.memory_space<vmem>>, vector<1x128x256xf32>
    %46 = vector.shape_cast %45 : vector<1x128x256xf32> to vector<128x256xf32>
    %cst_49 = arith.constant dense<0.000000e+00> : vector<14x256xf32>
    %47 = tpu.matmul %44, %46, %cst_49 {dimension_numbers = #tpu.dot_dimension_numbers<[1], [0], [0], [1], [0, 0, 1, 1], [], []>} : vector<14x128xf32>, vector<128x256xf32>, vector<14x256xf32> -> vector<14x256xf32>
    %48 = arith.addf %42, %47 : vector<14x256xf32>
    %c0_50 = arith.constant 0 : index
    %c2_51 = arith.constant 2 : index
    %c0_52 = arith.constant 0 : index
    %49 = vector.load %arg1[%c0_50, %c2_51, %c0_52] : memref<1x16x128xf32, #tpu.memory_space<vmem>>, vector<1x14x128xf32>
    %50 = vector.shape_cast %49 : vector<1x14x128xf32> to vector<14x128xf32>
    %c3_53 = arith.constant 3 : index
    %c0_54 = arith.constant 0 : index
    %c0_55 = arith.constant 0 : index
    %51 = vector.load %arg3[%c3_53, %c0_54, %c0_55] : memref<5x128x256xf32, #tpu.memory_space<vmem>>, vector<1x128x256xf32>
    %52 = vector.shape_cast %51 : vector<1x128x256xf32> to vector<128x256xf32>
    %cst_56 = arith.constant dense<0.000000e+00> : vector<14x256xf32>
    %53 = tpu.matmul %50, %52, %cst_56 {dimension_numbers = #tpu.dot_dimension_numbers<[1], [0], [0], [1], [0, 0, 1, 1], [], []>} : vector<14x128xf32>, vector<128x256xf32>, vector<14x256xf32> -> vector<14x256xf32>
    %54 = arith.addf %48, %53 : vector<14x256xf32>
    %c0_57 = arith.constant 0 : index
    %c2_58 = arith.constant 2 : index
    %c0_59 = arith.constant 0 : index
    %55 = vector.load %arg2[%c0_57, %c2_58, %c0_59] : memref<1x16x128xf32, #tpu.memory_space<vmem>>, vector<1x14x128xf32>
    %56 = vector.shape_cast %55 : vector<1x14x128xf32> to vector<14x128xf32>
    %c4_60 = arith.constant 4 : index
    %c0_61 = arith.constant 0 : index
    %c0_62 = arith.constant 0 : index
    %57 = vector.load %arg3[%c4_60, %c0_61, %c0_62] : memref<5x128x256xf32, #tpu.memory_space<vmem>>, vector<1x128x256xf32>
    %58 = vector.shape_cast %57 : vector<1x128x256xf32> to vector<128x256xf32>
    %cst_63 = arith.constant dense<0.000000e+00> : vector<14x256xf32>
    %59 = tpu.matmul %56, %58, %cst_63 {dimension_numbers = #tpu.dot_dimension_numbers<[1], [0], [0], [1], [0, 0, 1, 1], [], []>} : vector<14x128xf32>, vector<128x256xf32>, vector<14x256xf32> -> vector<14x256xf32>
    %60 = arith.addf %54, %59 : vector<14x256xf32>
    %61 = vector.extract_strided_slice %60 {offsets = [0, 0], sizes = [14, 128], strides = [1, 1]} : vector<14x256xf32> to vector<14x128xf32>
    %62 = vector.extract_strided_slice %60 {offsets = [0, 128], sizes = [14, 128], strides = [1, 1]} : vector<14x256xf32> to vector<14x128xf32>
    %63 = arith.maximumf %61, %62 : vector<14x128xf32>
    %64 = arith.maximumf %31, %63 : vector<14x128xf32>
    %c0_64 = arith.constant 0 : index
    %c0_65 = arith.constant 0 : index
    %65 = vector.load %arg4[%c0_64, %c0_65] : memref<1x128xf32, #tpu.memory_space<vmem>>, vector<1x128xf32>
    %66 = vector.broadcast %65 : vector<1x128xf32> to vector<14x128xf32>
    %67 = arith.addf %64, %66 : vector<14x128xf32>
    %cst_66 = arith.constant 0.000000e+00 : f32
    %68 = vector.broadcast %cst_66 : f32 to vector<14x128xf32>
    %69 = arith.maximumf %67, %68 : vector<14x128xf32>
    %c0_67 = arith.constant 0 : index
    %c0_68 = arith.constant 0 : index
    %c0_69 = arith.constant 0 : index
    %70 = vector.load %arg5[%c0_67, %c0_68, %c0_69] : memref<1x14x128xf32, #tpu.memory_space<vmem>>, vector<1x14x128xf32>
    %71 = vector.shape_cast %70 : vector<1x14x128xf32> to vector<14x128xf32>
    %72 = vector.shape_cast %69 : vector<14x128xf32> to vector<1x14x128xf32>
    tpu.vector_store %arg5[%c0_67, %c0_68, %c0_69], %72 {strides = array<i32>} : memref<1x14x128xf32, #tpu.memory_space<vmem>>, vector<1x14x128xf32>,
    return
  }
  func.func @transform_0(%arg0: i32) -> (i32, i32, i32) {
    %c0_i32 = arith.constant 0 : i32
    %c0_i32_0 = arith.constant 0 : i32
    %c0_i32_1 = arith.constant 0 : i32
    return %arg0, %c0_i32, %c0_i32_0 : i32, i32, i32
  }
  func.func @transform_1(%arg0: i32) -> (i32, i32, i32) {
    %c0_i32 = arith.constant 0 : i32
    %c0_i32_0 = arith.constant 0 : i32
    %c0_i32_1 = arith.constant 0 : i32
    return %arg0, %c0_i32, %c0_i32_0 : i32, i32, i32
  }
  func.func @transform_2(%arg0: i32) -> (i32, i32, i32) {
    %c0_i32 = arith.constant 0 : i32
    %c0_i32_0 = arith.constant 0 : i32
    %c0_i32_1 = arith.constant 0 : i32
    %c0_i32_2 = arith.constant 0 : i32
    return %c0_i32, %c0_i32_0, %c0_i32_1 : i32, i32, i32
  }
  func.func @transform_3(%arg0: i32) -> (i32, i32) {
    %c0_i32 = arith.constant 0 : i32
    %c0_i32_0 = arith.constant 0 : i32
    %c0_i32_1 = arith.constant 0 : i32
    return %c0_i32, %c0_i32_0 : i32, i32
  }
  func.func @transform_4(%arg0: i32) -> (i32, i32, i32) {
    %c0_i32 = arith.constant 0 : i32
    %c0_i32_0 = arith.constant 0 : i32
    %c0_i32_1 = arith.constant 0 : i32
    return %arg0, %c0_i32, %c0_i32_0 : i32, i32, i32
  }
}

module attributes {stable_mosaic.version = 11 : i64} {
  func.func @_conv_relu_pool_kernel(%arg0: i32, %arg1: memref<1x7x128xf32, #tpu.memory_space<vmem>>, %arg2: memref<1x7x128xf32, #tpu.memory_space<vmem>>, %arg3: memref<5x128x256xf32, #tpu.memory_space<vmem>>, %arg4: memref<1x128xf32, #tpu.memory_space<vmem>>, %arg5: memref<1x5x128xf32, #tpu.memory_space<vmem>>) attributes {dimension_semantics = [#tpu.dimension_semantics<parallel>], iteration_bounds = array<i64: 2>, scalar_prefetch = 0 : i64, scratch_operands = 0 : i64, tpu.core_type = #tpu.core_type<tc>, window_params = [{transform_indices = @transform_0, window_bounds = array<i64: 1, 7, 128>}, {transform_indices = @transform_1, window_bounds = array<i64: 1, 7, 128>}, {pipeline_mode = #tpu.pipeline_mode<synchronous>, transform_indices = @transform_2, window_bounds = array<i64: 5, 128, 256>}, {pipeline_mode = #tpu.pipeline_mode<synchronous>, transform_indices = @transform_3, window_bounds = array<i64: 1, 128>}, {transform_indices = @transform_4, window_bounds = array<i64: 1, 5, 128>}]} {
    %c0 = arith.constant 0 : index
    %c0_0 = arith.constant 0 : index
    %c0_1 = arith.constant 0 : index
    %0 = vector.load %arg1[%c0, %c0_0, %c0_1] : memref<1x7x128xf32, #tpu.memory_space<vmem>>, vector<1x5x128xf32>
    %1 = vector.shape_cast %0 : vector<1x5x128xf32> to vector<5x128xf32>
    %c0_2 = arith.constant 0 : index
    %c0_3 = arith.constant 0 : index
    %c0_4 = arith.constant 0 : index
    %2 = vector.load %arg3[%c0_2, %c0_3, %c0_4] : memref<5x128x256xf32, #tpu.memory_space<vmem>>, vector<1x128x256xf32>
    %3 = vector.shape_cast %2 : vector<1x128x256xf32> to vector<128x256xf32>
    %cst = arith.constant dense<0.000000e+00> : vector<5x256xf32>
    %4 = tpu.matmul %1, %3, %cst {dimension_numbers = #tpu.dot_dimension_numbers<[1], [0], [0], [1], [0, 0, 1, 1], [], []>} : vector<5x128xf32>, vector<128x256xf32>, vector<5x256xf32> -> vector<5x256xf32>
    %c0_5 = arith.constant 0 : index
    %c0_6 = arith.constant 0 : index
    %c0_7 = arith.constant 0 : index
    %5 = vector.load %arg2[%c0_5, %c0_6, %c0_7] : memref<1x7x128xf32, #tpu.memory_space<vmem>>, vector<1x5x128xf32>
    %6 = vector.shape_cast %5 : vector<1x5x128xf32> to vector<5x128xf32>
    %c1 = arith.constant 1 : index
    %c0_8 = arith.constant 0 : index
    %c0_9 = arith.constant 0 : index
    %7 = vector.load %arg3[%c1, %c0_8, %c0_9] : memref<5x128x256xf32, #tpu.memory_space<vmem>>, vector<1x128x256xf32>
    %8 = vector.shape_cast %7 : vector<1x128x256xf32> to vector<128x256xf32>
    %cst_10 = arith.constant dense<0.000000e+00> : vector<5x256xf32>
    %9 = tpu.matmul %6, %8, %cst_10 {dimension_numbers = #tpu.dot_dimension_numbers<[1], [0], [0], [1], [0, 0, 1, 1], [], []>} : vector<5x128xf32>, vector<128x256xf32>, vector<5x256xf32> -> vector<5x256xf32>
    %10 = arith.addf %4, %9 : vector<5x256xf32>
    %c0_11 = arith.constant 0 : index
    %c1_12 = arith.constant 1 : index
    %c0_13 = arith.constant 0 : index
    %11 = vector.load %arg1[%c0_11, %c1_12, %c0_13] : memref<1x7x128xf32, #tpu.memory_space<vmem>>, vector<1x5x128xf32>
    %12 = vector.shape_cast %11 : vector<1x5x128xf32> to vector<5x128xf32>
    %c2 = arith.constant 2 : index
    %c0_14 = arith.constant 0 : index
    %c0_15 = arith.constant 0 : index
    %13 = vector.load %arg3[%c2, %c0_14, %c0_15] : memref<5x128x256xf32, #tpu.memory_space<vmem>>, vector<1x128x256xf32>
    %14 = vector.shape_cast %13 : vector<1x128x256xf32> to vector<128x256xf32>
    %cst_16 = arith.constant dense<0.000000e+00> : vector<5x256xf32>
    %15 = tpu.matmul %12, %14, %cst_16 {dimension_numbers = #tpu.dot_dimension_numbers<[1], [0], [0], [1], [0, 0, 1, 1], [], []>} : vector<5x128xf32>, vector<128x256xf32>, vector<5x256xf32> -> vector<5x256xf32>
    %16 = arith.addf %10, %15 : vector<5x256xf32>
    %c0_17 = arith.constant 0 : index
    %c1_18 = arith.constant 1 : index
    %c0_19 = arith.constant 0 : index
    %17 = vector.load %arg2[%c0_17, %c1_18, %c0_19] : memref<1x7x128xf32, #tpu.memory_space<vmem>>, vector<1x5x128xf32>
    %18 = vector.shape_cast %17 : vector<1x5x128xf32> to vector<5x128xf32>
    %c3 = arith.constant 3 : index
    %c0_20 = arith.constant 0 : index
    %c0_21 = arith.constant 0 : index
    %19 = vector.load %arg3[%c3, %c0_20, %c0_21] : memref<5x128x256xf32, #tpu.memory_space<vmem>>, vector<1x128x256xf32>
    %20 = vector.shape_cast %19 : vector<1x128x256xf32> to vector<128x256xf32>
    %cst_22 = arith.constant dense<0.000000e+00> : vector<5x256xf32>
    %21 = tpu.matmul %18, %20, %cst_22 {dimension_numbers = #tpu.dot_dimension_numbers<[1], [0], [0], [1], [0, 0, 1, 1], [], []>} : vector<5x128xf32>, vector<128x256xf32>, vector<5x256xf32> -> vector<5x256xf32>
    %22 = arith.addf %16, %21 : vector<5x256xf32>
    %c0_23 = arith.constant 0 : index
    %c2_24 = arith.constant 2 : index
    %c0_25 = arith.constant 0 : index
    %23 = vector.load %arg1[%c0_23, %c2_24, %c0_25] : memref<1x7x128xf32, #tpu.memory_space<vmem>>, vector<1x5x128xf32>
    %24 = vector.shape_cast %23 : vector<1x5x128xf32> to vector<5x128xf32>
    %c4 = arith.constant 4 : index
    %c0_26 = arith.constant 0 : index
    %c0_27 = arith.constant 0 : index
    %25 = vector.load %arg3[%c4, %c0_26, %c0_27] : memref<5x128x256xf32, #tpu.memory_space<vmem>>, vector<1x128x256xf32>
    %26 = vector.shape_cast %25 : vector<1x128x256xf32> to vector<128x256xf32>
    %cst_28 = arith.constant dense<0.000000e+00> : vector<5x256xf32>
    %27 = tpu.matmul %24, %26, %cst_28 {dimension_numbers = #tpu.dot_dimension_numbers<[1], [0], [0], [1], [0, 0, 1, 1], [], []>} : vector<5x128xf32>, vector<128x256xf32>, vector<5x256xf32> -> vector<5x256xf32>
    %28 = arith.addf %22, %27 : vector<5x256xf32>
    %29 = vector.extract_strided_slice %28 {offsets = [0, 0], sizes = [5, 128], strides = [1, 1]} : vector<5x256xf32> to vector<5x128xf32>
    %30 = vector.extract_strided_slice %28 {offsets = [0, 128], sizes = [5, 128], strides = [1, 1]} : vector<5x256xf32> to vector<5x128xf32>
    %31 = arith.maximumf %29, %30 : vector<5x128xf32>
    %c0_29 = arith.constant 0 : index
    %c0_30 = arith.constant 0 : index
    %c0_31 = arith.constant 0 : index
    %32 = vector.load %arg2[%c0_29, %c0_30, %c0_31] : memref<1x7x128xf32, #tpu.memory_space<vmem>>, vector<1x5x128xf32>
    %33 = vector.shape_cast %32 : vector<1x5x128xf32> to vector<5x128xf32>
    %c0_32 = arith.constant 0 : index
    %c0_33 = arith.constant 0 : index
    %c0_34 = arith.constant 0 : index
    %34 = vector.load %arg3[%c0_32, %c0_33, %c0_34] : memref<5x128x256xf32, #tpu.memory_space<vmem>>, vector<1x128x256xf32>
    %35 = vector.shape_cast %34 : vector<1x128x256xf32> to vector<128x256xf32>
    %cst_35 = arith.constant dense<0.000000e+00> : vector<5x256xf32>
    %36 = tpu.matmul %33, %35, %cst_35 {dimension_numbers = #tpu.dot_dimension_numbers<[1], [0], [0], [1], [0, 0, 1, 1], [], []>} : vector<5x128xf32>, vector<128x256xf32>, vector<5x256xf32> -> vector<5x256xf32>
    %c0_36 = arith.constant 0 : index
    %c1_37 = arith.constant 1 : index
    %c0_38 = arith.constant 0 : index
    %37 = vector.load %arg1[%c0_36, %c1_37, %c0_38] : memref<1x7x128xf32, #tpu.memory_space<vmem>>, vector<1x5x128xf32>
    %38 = vector.shape_cast %37 : vector<1x5x128xf32> to vector<5x128xf32>
    %c1_39 = arith.constant 1 : index
    %c0_40 = arith.constant 0 : index
    %c0_41 = arith.constant 0 : index
    %39 = vector.load %arg3[%c1_39, %c0_40, %c0_41] : memref<5x128x256xf32, #tpu.memory_space<vmem>>, vector<1x128x256xf32>
    %40 = vector.shape_cast %39 : vector<1x128x256xf32> to vector<128x256xf32>
    %cst_42 = arith.constant dense<0.000000e+00> : vector<5x256xf32>
    %41 = tpu.matmul %38, %40, %cst_42 {dimension_numbers = #tpu.dot_dimension_numbers<[1], [0], [0], [1], [0, 0, 1, 1], [], []>} : vector<5x128xf32>, vector<128x256xf32>, vector<5x256xf32> -> vector<5x256xf32>
    %42 = arith.addf %36, %41 : vector<5x256xf32>
    %c0_43 = arith.constant 0 : index
    %c1_44 = arith.constant 1 : index
    %c0_45 = arith.constant 0 : index
    %43 = vector.load %arg2[%c0_43, %c1_44, %c0_45] : memref<1x7x128xf32, #tpu.memory_space<vmem>>, vector<1x5x128xf32>
    %44 = vector.shape_cast %43 : vector<1x5x128xf32> to vector<5x128xf32>
    %c2_46 = arith.constant 2 : index
    %c0_47 = arith.constant 0 : index
    %c0_48 = arith.constant 0 : index
    %45 = vector.load %arg3[%c2_46, %c0_47, %c0_48] : memref<5x128x256xf32, #tpu.memory_space<vmem>>, vector<1x128x256xf32>
    %46 = vector.shape_cast %45 : vector<1x128x256xf32> to vector<128x256xf32>
    %cst_49 = arith.constant dense<0.000000e+00> : vector<5x256xf32>
    %47 = tpu.matmul %44, %46, %cst_49 {dimension_numbers = #tpu.dot_dimension_numbers<[1], [0], [0], [1], [0, 0, 1, 1], [], []>} : vector<5x128xf32>, vector<128x256xf32>, vector<5x256xf32> -> vector<5x256xf32>
    %48 = arith.addf %42, %47 : vector<5x256xf32>
    %c0_50 = arith.constant 0 : index
    %c2_51 = arith.constant 2 : index
    %c0_52 = arith.constant 0 : index
    %49 = vector.load %arg1[%c0_50, %c2_51, %c0_52] : memref<1x7x128xf32, #tpu.memory_space<vmem>>, vector<1x5x128xf32>
    %50 = vector.shape_cast %49 : vector<1x5x128xf32> to vector<5x128xf32>
    %c3_53 = arith.constant 3 : index
    %c0_54 = arith.constant 0 : index
    %c0_55 = arith.constant 0 : index
    %51 = vector.load %arg3[%c3_53, %c0_54, %c0_55] : memref<5x128x256xf32, #tpu.memory_space<vmem>>, vector<1x128x256xf32>
    %52 = vector.shape_cast %51 : vector<1x128x256xf32> to vector<128x256xf32>
    %cst_56 = arith.constant dense<0.000000e+00> : vector<5x256xf32>
    %53 = tpu.matmul %50, %52, %cst_56 {dimension_numbers = #tpu.dot_dimension_numbers<[1], [0], [0], [1], [0, 0, 1, 1], [], []>} : vector<5x128xf32>, vector<128x256xf32>, vector<5x256xf32> -> vector<5x256xf32>
    %54 = arith.addf %48, %53 : vector<5x256xf32>
    %c0_57 = arith.constant 0 : index
    %c2_58 = arith.constant 2 : index
    %c0_59 = arith.constant 0 : index
    %55 = vector.load %arg2[%c0_57, %c2_58, %c0_59] : memref<1x7x128xf32, #tpu.memory_space<vmem>>, vector<1x5x128xf32>
    %56 = vector.shape_cast %55 : vector<1x5x128xf32> to vector<5x128xf32>
    %c4_60 = arith.constant 4 : index
    %c0_61 = arith.constant 0 : index
    %c0_62 = arith.constant 0 : index
    %57 = vector.load %arg3[%c4_60, %c0_61, %c0_62] : memref<5x128x256xf32, #tpu.memory_space<vmem>>, vector<1x128x256xf32>
    %58 = vector.shape_cast %57 : vector<1x128x256xf32> to vector<128x256xf32>
    %cst_63 = arith.constant dense<0.000000e+00> : vector<5x256xf32>
    %59 = tpu.matmul %56, %58, %cst_63 {dimension_numbers = #tpu.dot_dimension_numbers<[1], [0], [0], [1], [0, 0, 1, 1], [], []>} : vector<5x128xf32>, vector<128x256xf32>, vector<5x256xf32> -> vector<5x256xf32>
    %60 = arith.addf %54, %59 : vector<5x256xf32>
    %61 = vector.extract_strided_slice %60 {offsets = [0, 0], sizes = [5, 128], strides = [1, 1]} : vector<5x256xf32> to vector<5x128xf32>
    %62 = vector.extract_strided_slice %60 {offsets = [0, 128], sizes = [5, 128], strides = [1, 1]} : vector<5x256xf32> to vector<5x128xf32>
    %63 = arith.maximumf %61, %62 : vector<5x128xf32>
    %64 = arith.maximumf %31, %63 : vector<5x128xf32>
    %c0_64 = arith.constant 0 : index
    %c0_65 = arith.constant 0 : index
    %65 = vector.load %arg4[%c0_64, %c0_65] : memref<1x128xf32, #tpu.memory_space<vmem>>, vector<1x128xf32>
    %66 = vector.broadcast %65 : vector<1x128xf32> to vector<5x128xf32>
    %67 = arith.addf %64, %66 : vector<5x128xf32>
    %cst_66 = arith.constant 0.000000e+00 : f32
    %68 = vector.broadcast %cst_66 : f32 to vector<5x128xf32>
    %69 = arith.maximumf %67, %68 : vector<5x128xf32>
    %c0_67 = arith.constant 0 : index
    %c0_68 = arith.constant 0 : index
    %c0_69 = arith.constant 0 : index
    %70 = vector.load %arg5[%c0_67, %c0_68, %c0_69] : memref<1x5x128xf32, #tpu.memory_space<vmem>>, vector<1x5x128xf32>
    %71 = vector.shape_cast %70 : vector<1x5x128xf32> to vector<5x128xf32>
    %72 = vector.shape_cast %69 : vector<5x128xf32> to vector<1x5x128xf32>
    tpu.vector_store %arg5[%c0_67, %c0_68, %c0_69], %72 {strides = array<i32>} : memref<1x5x128xf32, #tpu.memory_space<vmem>>, vector<1x5x128xf32>,
    return
  }
  func.func @transform_0(%arg0: i32) -> (i32, i32, i32) {
    %c0_i32 = arith.constant 0 : i32
    %c0_i32_0 = arith.constant 0 : i32
    %c0_i32_1 = arith.constant 0 : i32
    return %arg0, %c0_i32, %c0_i32_0 : i32, i32, i32
  }
  func.func @transform_1(%arg0: i32) -> (i32, i32, i32) {
    %c0_i32 = arith.constant 0 : i32
    %c0_i32_0 = arith.constant 0 : i32
    %c0_i32_1 = arith.constant 0 : i32
    return %arg0, %c0_i32, %c0_i32_0 : i32, i32, i32
  }
  func.func @transform_2(%arg0: i32) -> (i32, i32, i32) {
    %c0_i32 = arith.constant 0 : i32
    %c0_i32_0 = arith.constant 0 : i32
    %c0_i32_1 = arith.constant 0 : i32
    %c0_i32_2 = arith.constant 0 : i32
    return %c0_i32, %c0_i32_0, %c0_i32_1 : i32, i32, i32
  }
  func.func @transform_3(%arg0: i32) -> (i32, i32) {
    %c0_i32 = arith.constant 0 : i32
    %c0_i32_0 = arith.constant 0 : i32
    %c0_i32_1 = arith.constant 0 : i32
    return %c0_i32, %c0_i32_0 : i32, i32
  }
  func.func @transform_4(%arg0: i32) -> (i32, i32, i32) {
    %c0_i32 = arith.constant 0 : i32
    %c0_i32_0 = arith.constant 0 : i32
    %c0_i32_1 = arith.constant 0 : i32
    return %arg0, %c0_i32, %c0_i32_0 : i32, i32, i32
  }
}

module attributes {stable_mosaic.version = 11 : i64} {
  func.func @_mlp_kernel(%arg0: i32, %arg1: memref<8x640xf32, #tpu.memory_space<vmem>>, %arg2: memref<640x128xf32, #tpu.memory_space<vmem>>, %arg3: memref<1x128xf32, #tpu.memory_space<vmem>>, %arg4: memref<128x128xf32, #tpu.memory_space<vmem>>, %arg5: memref<1x128xf32, #tpu.memory_space<vmem>>, %arg6: memref<128x128xf32, #tpu.memory_space<vmem>>, %arg7: memref<1x128xf32, #tpu.memory_space<vmem>>, %arg8: memref<8x128xf32, #tpu.memory_space<vmem>>) attributes {dimension_semantics = [#tpu.dimension_semantics<parallel>], iteration_bounds = array<i64: 1>, scalar_prefetch = 0 : i64, scratch_operands = 0 : i64, tpu.core_type = #tpu.core_type<tc>, window_params = [{transform_indices = @transform_0, window_bounds = array<i64: 8, 640>}, {pipeline_mode = #tpu.pipeline_mode<synchronous>, transform_indices = @transform_1, window_bounds = array<i64: 640, 128>}, {pipeline_mode = #tpu.pipeline_mode<synchronous>, transform_indices = @transform_2, window_bounds = array<i64: 1, 128>}, {pipeline_mode = #tpu.pipeline_mode<synchronous>, transform_indices = @transform_3, window_bounds = array<i64: 128, 128>}, {pipeline_mode = #tpu.pipeline_mode<synchronous>, transform_indices = @transform_4, window_bounds = array<i64: 1, 128>}, {pipeline_mode = #tpu.pipeline_mode<synchronous>, transform_indices = @transform_5, window_bounds = array<i64: 128, 128>}, {pipeline_mode = #tpu.pipeline_mode<synchronous>, transform_indices = @transform_6, window_bounds = array<i64: 1, 128>}, {transform_indices = @transform_7, window_bounds = array<i64: 8, 128>}]} {
    %c0 = arith.constant 0 : index
    %c0_0 = arith.constant 0 : index
    %0 = vector.load %arg1[%c0, %c0_0] : memref<8x640xf32, #tpu.memory_space<vmem>>, vector<8x640xf32>
    %c0_1 = arith.constant 0 : index
    %c0_2 = arith.constant 0 : index
    %1 = vector.load %arg2[%c0_1, %c0_2] : memref<640x128xf32, #tpu.memory_space<vmem>>, vector<640x128xf32>
    %cst = arith.constant dense<0.000000e+00> : vector<8x128xf32>
    %2 = tpu.matmul %0, %1, %cst {dimension_numbers = #tpu.dot_dimension_numbers<[1], [0], [0], [1], [0, 0, 1, 1], [], []>} : vector<8x640xf32>, vector<640x128xf32>, vector<8x128xf32> -> vector<8x128xf32>
    %c0_3 = arith.constant 0 : index
    %c0_4 = arith.constant 0 : index
    %3 = vector.load %arg3[%c0_3, %c0_4] : memref<1x128xf32, #tpu.memory_space<vmem>>, vector<1x128xf32>
    %4 = vector.broadcast %3 : vector<1x128xf32> to vector<8x128xf32>
    %5 = arith.addf %2, %4 : vector<8x128xf32>
    %cst_5 = arith.constant 0.000000e+00 : f32
    %6 = vector.broadcast %cst_5 : f32 to vector<8x128xf32>
    %7 = arith.maximumf %5, %6 : vector<8x128xf32>
    %c0_6 = arith.constant 0 : index
    %c0_7 = arith.constant 0 : index
    %8 = vector.load %arg4[%c0_6, %c0_7] : memref<128x128xf32, #tpu.memory_space<vmem>>, vector<128x128xf32>
    %cst_8 = arith.constant dense<0.000000e+00> : vector<8x128xf32>
    %9 = tpu.matmul %7, %8, %cst_8 {dimension_numbers = #tpu.dot_dimension_numbers<[1], [0], [0], [1], [0, 0, 1, 1], [], []>} : vector<8x128xf32>, vector<128x128xf32>, vector<8x128xf32> -> vector<8x128xf32>
    %c0_9 = arith.constant 0 : index
    %c0_10 = arith.constant 0 : index
    %10 = vector.load %arg5[%c0_9, %c0_10] : memref<1x128xf32, #tpu.memory_space<vmem>>, vector<1x128xf32>
    %11 = vector.broadcast %10 : vector<1x128xf32> to vector<8x128xf32>
    %12 = arith.addf %9, %11 : vector<8x128xf32>
    %cst_11 = arith.constant 0.000000e+00 : f32
    %13 = vector.broadcast %cst_11 : f32 to vector<8x128xf32>
    %14 = arith.maximumf %12, %13 : vector<8x128xf32>
    %c0_12 = arith.constant 0 : index
    %c0_13 = arith.constant 0 : index
    %15 = vector.load %arg6[%c0_12, %c0_13] : memref<128x128xf32, #tpu.memory_space<vmem>>, vector<128x128xf32>
    %cst_14 = arith.constant dense<0.000000e+00> : vector<8x128xf32>
    %16 = tpu.matmul %14, %15, %cst_14 {dimension_numbers = #tpu.dot_dimension_numbers<[1], [0], [0], [1], [0, 0, 1, 1], [], []>} : vector<8x128xf32>, vector<128x128xf32>, vector<8x128xf32> -> vector<8x128xf32>
    %c0_15 = arith.constant 0 : index
    %c0_16 = arith.constant 0 : index
    %17 = vector.load %arg7[%c0_15, %c0_16] : memref<1x128xf32, #tpu.memory_space<vmem>>, vector<1x128xf32>
    %18 = vector.broadcast %17 : vector<1x128xf32> to vector<8x128xf32>
    %19 = arith.addf %16, %18 : vector<8x128xf32>
    %c0_17 = arith.constant 0 : index
    %c0_18 = arith.constant 0 : index
    %20 = vector.load %arg8[%c0_17, %c0_18] : memref<8x128xf32, #tpu.memory_space<vmem>>, vector<8x128xf32>
    tpu.vector_store %arg8[%c0_17, %c0_18], %19 {strides = array<i32>} : memref<8x128xf32, #tpu.memory_space<vmem>>, vector<8x128xf32>,
    return
  }
  func.func @transform_0(%arg0: i32) -> (i32, i32) {
    %c0_i32 = arith.constant 0 : i32
    %c0_i32_0 = arith.constant 0 : i32
    return %arg0, %c0_i32 : i32, i32
  }
  func.func @transform_1(%arg0: i32) -> (i32, i32) {
    %c0_i32 = arith.constant 0 : i32
    %c0_i32_0 = arith.constant 0 : i32
    %c0_i32_1 = arith.constant 0 : i32
    return %c0_i32, %c0_i32_0 : i32, i32
  }
  func.func @transform_2(%arg0: i32) -> (i32, i32) {
    %c0_i32 = arith.constant 0 : i32
    %c0_i32_0 = arith.constant 0 : i32
    %c0_i32_1 = arith.constant 0 : i32
    return %c0_i32, %c0_i32_0 : i32, i32
  }
  func.func @transform_3(%arg0: i32) -> (i32, i32) {
    %c0_i32 = arith.constant 0 : i32
    %c0_i32_0 = arith.constant 0 : i32
    %c0_i32_1 = arith.constant 0 : i32
    return %c0_i32, %c0_i32_0 : i32, i32
  }
  func.func @transform_4(%arg0: i32) -> (i32, i32) {
    %c0_i32 = arith.constant 0 : i32
    %c0_i32_0 = arith.constant 0 : i32
    %c0_i32_1 = arith.constant 0 : i32
    return %c0_i32, %c0_i32_0 : i32, i32
  }
  func.func @transform_5(%arg0: i32) -> (i32, i32) {
    %c0_i32 = arith.constant 0 : i32
    %c0_i32_0 = arith.constant 0 : i32
    %c0_i32_1 = arith.constant 0 : i32
    return %c0_i32, %c0_i32_0 : i32, i32
  }
  func.func @transform_6(%arg0: i32) -> (i32, i32) {
    %c0_i32 = arith.constant 0 : i32
    %c0_i32_0 = arith.constant 0 : i32
    %c0_i32_1 = arith.constant 0 : i32
    return %c0_i32, %c0_i32_0 : i32, i32
  }
  func.func @transform_7(%arg0: i32) -> (i32, i32) {
    %c0_i32 = arith.constant 0 : i32
    %c0_i32_0 = arith.constant 0 : i32
    return %arg0, %c0_i32 : i32, i32
  }
}

</mosaic_0001>

<llo_original>
// kernel: tile.13
$region0: #{tile.13}
  #allocation0 [shape = 's32[1]{0}', space=sflag, size = 0x4, scoped, tag = 'scoped memory for tile.13']
  %s0 = inlined_call_operand.vmem [shape: f32[4], index: 0, kind: input, shape index: {}]
  %s1 = inlined_call_operand.vmem [shape: f32[14,4], index: 1, kind: output, shape index: {}]
  // Predicated region
  $region2: #{tile.13} parent=0 // pred_check
    _
  $region3: #{tile.13} parent=0 // pred_check_branch
    %3 = sbr.rel (0) target = $region5
  $region4: #{tile.13} parent=0 // pred_region
    _
  $region5: #{tile.13} parent=0 // pred_fallthru
    _
  %v4 = vld [vmem:[%s0] ss:$0 sm:$0xff]
  %5 = vst [vmem:[%s1] sm:$0xff] %v4
  %s6 = scalar_lea.vmem %s1, 8
  %7 = vst [vmem:[%s6] sm:$0xff] %v4

// kernel: tile.14
$region0: #{tile.14}
  %s0 = inlined_call_operand.vmem [shape: f32[14,4], index: 0, kind: input, shape index: {}]
  %s1 = inlined_call_operand.vmem [shape: f32[56], index: 1, kind: output, shape index: {}]
  $region1: #{tile.14} parent=0
    #allocation0 [shape = 'u8[4096]{0}', space=vmem, size = 0x1000, scoped, tag = 'scoped mem for output reshape']
    %v2 = vld [vmem:[%s0] sm:$0x1]
    %vm3 = vcmask 31744
    %4 = vst.msk [vmem:[#allocation0] sm:$0x1] %vm3, %v2
    %s5 = scalar_lea.vmem %s0, 13
    %v6 = vld [vmem:[%s5] sm:$0x1]
    %7 = vrot.lane.b32.xlu0 %v6, 52
    %v8 = vpop.permute.xlu0 %7
    %vm9 = vcmask 458144
    %10 = vst.msk [vmem:[#allocation0] sm:$0x1] %vm9, %v8
    %s11 = scalar_lea.vmem %s0, 12
    %v12 = vld [vmem:[%s11] sm:$0x1]
    %13 = vrot.lane.b32.xlu0 %v12, 48
    %v14 = vpop.permute.xlu0 %13
    %vm15 = vcmask 425344
    %16 = vst.msk [vmem:[#allocation0] sm:$0x1] %vm15, %v14
    %s17 = scalar_lea.vmem %s0, 11
    %v18 = vld [vmem:[%s17] sm:$0x1]
    %19 = vrot.lane.b32.xlu0 %v18, 44
    %v20 = vpop.permute.xlu0 %19
    %vm21 = vcmask 392544
    %22 = vst.msk [vmem:[#allocation0] sm:$0x1] %vm21, %v20
    %s23 = scalar_lea.vmem %s0, 10
    %v24 = vld [vmem:[%s23] sm:$0x1]
    %25 = vrot.lane.b32.xlu0 %v24, 40
    %v26 = vpop.permute.xlu0 %25
    %vm27 = vcmask 359744
    %28 = vst.msk [vmem:[#allocation0] sm:$0x1] %vm27, %v26
    %s29 = scalar_lea.vmem %s0, 9
    %v30 = vld [vmem:[%s29] sm:$0x1]
    %31 = vrot.lane.b32.xlu0 %v30, 36
    %v32 = vpop.permute.xlu0 %31
    %vm33 = vcmask 326944
    %34 = vst.msk [vmem:[#allocation0] sm:$0x1] %vm33, %v32
    %s35 = scalar_lea.vmem %s0, 8
    %v36 = vld [vmem:[%s35] sm:$0x1]
    %37 = vrot.lane.b32.xlu0 %v36, 32
    %v38 = vpop.permute.xlu0 %37
    %vm39 = vcmask 294144
    %40 = vst.msk [vmem:[#allocation0] sm:$0x1] %vm39, %v38
    %s41 = scalar_lea.vmem %s0, 7
    %v42 = vld [vmem:[%s41] sm:$0x1]
    %43 = vrot.lane.b32.xlu0 %v42, 28
    %v44 = vpop.permute.xlu0 %43
    %vm45 = vcmask 261344
    %46 = vst.msk [vmem:[#allocation0] sm:$0x1] %vm45, %v44
    %s47 = scalar_lea.vmem %s0, 6
    %v48 = vld [vmem:[%s47] sm:$0x1]
    %49 = vrot.lane.b32.xlu0 %v48, 24
    %v50 = vpop.permute.xlu0 %49
    %vm51 = vcmask 228544
    %52 = vst.msk [vmem:[#allocation0] sm:$0x1] %vm51, %v50
    %s53 = scalar_lea.vmem %s0, 5
    %v54 = vld [vmem:[%s53] sm:$0x1]
    %55 = vrot.lane.b32.xlu0 %v54, 20
    %v56 = vpop.permute.xlu0 %55
    %vm57 = vcmask 195744
    %58 = vst.msk [vmem:[#allocation0] sm:$0x1] %vm57, %v56
    %s59 = scalar_lea.vmem %s0, 4
    %v60 = vld [vmem:[%s59] sm:$0x1]
    %61 = vrot.lane.b32.xlu0 %v60, 16
    %v62 = vpop.permute.xlu0 %61
    %vm63 = vcmask 162944
    %64 = vst.msk [vmem:[#allocation0] sm:$0x1] %vm63, %v62
    %s65 = scalar_lea.vmem %s0, 3
    %v66 = vld [vmem:[%s65] sm:$0x1]
    %67 = vrot.lane.b32.xlu0 %v66, 12
    %v68 = vpop.permute.xlu0 %67
    %vm69 = vcmask 130144
    %70 = vst.msk [vmem:[#allocation0] sm:$0x1] %vm69, %v68
    %s71 = scalar_lea.vmem %s0, 2
    %v72 = vld [vmem:[%s71] sm:$0x1]
    %73 = vrot.lane.b32.xlu0 %v72, 8
    %v74 = vpop.permute.xlu0 %73
    %vm75 = vcmask 97344
    %76 = vst.msk [vmem:[#allocation0] sm:$0x1] %vm75, %v74
    %s77 = scalar_lea.vmem %s0, 1
    %v78 = vld [vmem:[%s77] sm:$0x1]
    %79 = vrot.lane.b32.xlu0 %v78, 4
    %v80 = vpop.permute.xlu0 %79
    %vm81 = vcmask 64544
    %82 = vst.msk [vmem:[#allocation0] sm:$0x1] %vm81, %v80
    %s84 = ssub.s32 2, 1
    %v85 = vld [vmem:[#allocation0] sm:%s84]
    %s87 = ssub.s32 2, 1
    %88 = vst [vmem:[%s1] sm:%s87] %v85

// kernel: classic_model_forward.3
$region0: #{classic_model_forward.3}
  #allocation0 [shape = 'u32[]', space=smem, size = 0x4, offset = 0x4, fixed_abs, tag = 'smem constant byte address 0x4 - core index']
  #allocation1 [shape = 'u32[72,128]{1,0:T(1,128)}', space=vmem, size = 0x9000, scoped, tag = 'internal scratch']
  %s0 = inlined_call_operand.vmem [shape: f32[2,16,128], index: 0, kind: input, shape index: {}]
  %s1 = inlined_call_operand.vmem [shape: f32[2,16,128], index: 1, kind: input, shape index: {}]
  %s2 = inlined_call_operand.vmem [shape: f32[5,128,256], index: 2, kind: input, shape index: {}]
  %s3 = inlined_call_operand.vmem [shape: f32[1,128], index: 3, kind: input, shape index: {}]
  %s4 = inlined_call_operand.vmem [shape: f32[2,14,128], index: 4, kind: output, shape index: {}]
  %s5 = sld [smem:[#allocation0]]
  $region49: #{classic_model_forward.3} parent=0
    _
  %s7 = ssub.s32 1, %s5
  %s8 = scalar_select 0, %s7, %s5
  loop: start=0, step=1, limit=4
  $region2: #{classic_model_forward.3} parent=0 // loop_pre_header
    _
  $region3: #{classic_model_forward.3} parent=0 // loop_header
    %s10 = sphi 0, %s14
    %p11 = scmp.ge.s32.totalorder %s10, 4
    %s20 = sphi 0, %s22
    %s23 = sphi 0, %s20
    %s24 = sphi 0, %s23
    %s40 = sphi 0, %s24
    %s46 = sphi 0, %s48
    %s49 = sphi 0, %s46
    %s50 = sphi 0, %s49
    %s66 = sphi 0, %s50
    %s70 = sphi 0, %s70
    %s72 = sphi 0, %s70
    %s73 = sphi 0, %s72
    %s87 = sphi 0, %s73
    %s91 = sphi 0, %s91
    %s93 = sphi 0, %s91
    %s94 = sphi 0, %s93
    %s108 = sphi 0, %s94
    %s114 = sphi 0, %s116
    %s117 = sphi 0, %s114
    %s118 = sphi 0, %s117
    %s134 = sphi 0, %s118
  $region4: #{classic_model_forward.3} parent=0 // loop_header_branch
    %13 = sbr.rel (%p11) target = $region8
  $region5: #{classic_model_forward.3} parent=0 // loop_body
    %s15 = ssub.s32 %s10, 1
    %s16 = ssub.s32 %s10, 2
    %s17 = sadd.s32 %s10, 1
    %s18 = ssub.s32 %s10, %s17
    %p19 = scmp.eq.s32.totalorder %s18, 0
    %s21 = sadd.s32 %s20, 1
    %s22 = scalar_select %p19, %s20, %s21
    %p25 = pneg %p19
    %p26 = scmp.eq.s32.totalorder %s10, 1
    %p27 = por %p25, %p26
    %p28 = scmp.ne.s32.totalorder %s20, %s23
    %p29 = scmp.eq.s32.totalorder %s10, 0
    %p30 = por %p28, %p29
    %p31 = scmp.ne.s32.totalorder %s20, %s23
    %p32 = scmp.eq.s32.totalorder %s15, 1
    %p33 = por %p31, %p32
    %p34 = scmp.ne.s32.totalorder %s23, %s24
    %p35 = scmp.eq.s32.totalorder %s15, 0
    %p36 = por %p34, %p35
    %p37 = scmp.ne.s32.totalorder %s23, %s24
    %p38 = scmp.eq.s32.totalorder %s16, 1
    %p39 = por %p37, %p38
    %p41 = scmp.ne.s32.totalorder %s24, %s40
    %p42 = scmp.eq.s32.totalorder %s16, 0
    %p43 = por %p41, %p42
    %s44 = ssub.s32 %s10, %s17
    %p45 = scmp.eq.s32.totalorder %s44, 0
    %s47 = sadd.s32 %s46, 1
    %s48 = scalar_select %p45, %s46, %s47
    %p51 = pneg %p45
    %p52 = scmp.eq.s32.totalorder %s10, 1
    %p53 = por %p51, %p52
    %p54 = scmp.ne.s32.totalorder %s46, %s49
    %p55 = scmp.eq.s32.totalorder %s10, 0
    %p56 = por %p54, %p55
    %p57 = scmp.ne.s32.totalorder %s46, %s49
    %p58 = scmp.eq.s32.totalorder %s15, 1
    %p59 = por %p57, %p58
    %p60 = scmp.ne.s32.totalorder %s49, %s50
    %p61 = scmp.eq.s32.totalorder %s15, 0
    %p62 = por %p60, %p61
    %p63 = scmp.ne.s32.totalorder %s49, %s50
    %p64 = scmp.eq.s32.totalorder %s16, 1
    %p65 = por %p63, %p64
    %p67 = scmp.ne.s32.totalorder %s50, %s66
    %p68 = scmp.eq.s32.totalorder %s16, 0
    %p69 = por %p67, %p68
    %s71 = sadd.s32 %s70, 1
    %p74 = scmp.eq.s32.totalorder %s10, 1
    %p75 = scmp.ne.s32.totalorder %s70, %s72
    %p76 = scmp.eq.s32.totalorder %s10, 0
    %p77 = por %p75, %p76
    %p78 = scmp.ne.s32.totalorder %s70, %s72
    %p79 = scmp.eq.s32.totalorder %s15, 1
    %p80 = por %p78, %p79
    %p81 = scmp.ne.s32.totalorder %s72, %s73
    %p82 = scmp.eq.s32.totalorder %s15, 0
    %p83 = por %p81, %p82
    %p84 = scmp.ne.s32.totalorder %s72, %s73
    %p85 = scmp.eq.s32.totalorder %s16, 1
    %p86 = por %p84, %p85
    %p88 = scmp.ne.s32.totalorder %s73, %s87
    %p89 = scmp.eq.s32.totalorder %s16, 0
    %p90 = por %p88, %p89
    %s92 = sadd.s32 %s91, 1
    %p95 = scmp.eq.s32.totalorder %s10, 1
    %p96 = scmp.ne.s32.totalorder %s91, %s93
    %p97 = scmp.eq.s32.totalorder %s10, 0
    %p98 = por %p96, %p97
    %p99 = scmp.ne.s32.totalorder %s91, %s93
    %p100 = scmp.eq.s32.totalorder %s15, 1
    %p101 = por %p99, %p100
    %p102 = scmp.ne.s32.totalorder %s93, %s94
    %p103 = scmp.eq.s32.totalorder %s15, 0
    %p104 = por %p102, %p103
    %p105 = scmp.ne.s32.totalorder %s93, %s94
    %p106 = scmp.eq.s32.totalorder %s16, 1
    %p107 = por %p105, %p106
    %p109 = scmp.ne.s32.totalorder %s94, %s108
    %p110 = scmp.eq.s32.totalorder %s16, 0
    %p111 = por %p109, %p110
    %s112 = ssub.s32 %s10, %s17
    %p113 = scmp.eq.s32.totalorder %s112, 0
    %s115 = sadd.s32 %s114, 1
    %s116 = scalar_select %p113, %s114, %s115
    %p119 = pneg %p113
    %p120 = scmp.eq.s32.totalorder %s10, 1
    %p121 = por %p119, %p120
    %p122 = scmp.ne.s32.totalorder %s114, %s117
    %p123 = scmp.eq.s32.totalorder %s10, 0
    %p124 = por %p122, %p123
    %p125 = scmp.ne.s32.totalorder %s114, %s117
    %p126 = scmp.eq.s32.totalorder %s15, 1
    %p127 = por %p125, %p126
    %p128 = scmp.ne.s32.totalorder %s117, %s118
    %p129 = scmp.eq.s32.totalorder %s15, 0
    %p130 = por %p128, %p129
    %p131 = scmp.ne.s32.totalorder %s117, %s118
    %p132 = scmp.eq.s32.totalorder %s16, 1
    %p133 = por %p131, %p132
    %p135 = scmp.ne.s32.totalorder %s118, %s134
    %p136 = scmp.eq.s32.totalorder %s16, 0
    %p137 = por %p135, %p136
    %p138 = scmp.le.s32.totalorder 1, %s10
    %p139 = scmp.lt.s32.totalorder %s10, 3
    %p140 = pnand %p138, %p139
    %p141 = pneg %p140
    // Predicated region
    $region9: #{classic_model_forward.3} parent=5 // pred_check
      _
    $region10: #{classic_model_forward.3} parent=5 // pred_check_branch
      %143 = sbr.rel (%p140) target = $region12
    $region11: #{classic_model_forward.3} parent=5 // pred_region
      %s144 = ssub.s32 %s10, 1
      // Predicated region
      $region13: #{classic_model_forward.3} parent=11 // pred_check
        %p145 = pneg %p83
      $region14: #{classic_model_forward.3} parent=11 // pred_check_branch
        %147 = sbr.rel (%p145) target = $region16
      $region15: #{classic_model_forward.3} parent=11 // pred_region
        _
      $region16: #{classic_model_forward.3} parent=11 // pred_fallthru
        _
      // Predicated region
      $region17: #{classic_model_forward.3} parent=11 // pred_check
        %p148 = pneg %p104
      $region18: #{classic_model_forward.3} parent=11 // pred_check_branch
        %150 = sbr.rel (%p148) target = $region20
      $region19: #{classic_model_forward.3} parent=11 // pred_region
        _
      $region20: #{classic_model_forward.3} parent=11 // pred_fallthru
        _
    $region12: #{classic_model_forward.3} parent=5 // pred_fallthru
      _
    %p151 = scmp.lt.s32.totalorder %s10, 2
    // Predicated region
    $region21: #{classic_model_forward.3} parent=5 // pred_check
      %p152 = pneg %p151
    $region22: #{classic_model_forward.3} parent=5 // pred_check_branch
      %154 = sbr.rel (%p152) target = $region24
    $region23: #{classic_model_forward.3} parent=5 // pred_region
      // Predicated region
      $region25: #{classic_model_forward.3} parent=23 // pred_check
        %p155 = pneg %p30
      $region26: #{classic_model_forward.3} parent=23 // pred_check_branch
        %157 = sbr.rel (%p155) target = $region28
      $region27: #{classic_model_forward.3} parent=23 // pred_region
        %p158 = scmp.lt.s32.totalorder %s10, 1
        %s159 = scalar_select %p158, %s10, 1
        %s160 = smul.addr %s159, 2
        %s161 = smul.addr %s160, 8
        %s162 = scalar_lea.vmem %s0, %s161
      $region28: #{classic_model_forward.3} parent=23 // pred_fallthru
        _
      // Predicated region
      $region29: #{classic_model_forward.3} parent=23 // pred_check
        %p163 = pneg %p56
      $region30: #{classic_model_forward.3} parent=23 // pred_check_branch
        %165 = sbr.rel (%p163) target = $region32
      $region31: #{classic_model_forward.3} parent=23 // pred_region
        %p166 = scmp.lt.s32.totalorder %s10, 1
        %s167 = scalar_select %p166, %s10, 1
        %s168 = smul.addr %s167, 2
        %s169 = smul.addr %s168, 8
        %s170 = scalar_lea.vmem %s1, %s169
      $region32: #{classic_model_forward.3} parent=23 // pred_fallthru
        _
    $region24: #{classic_model_forward.3} parent=5 // pred_fallthru
      _
    %p171 = scmp.le.s32.totalorder 1, %s10
    %p172 = scmp.lt.s32.totalorder %s10, 3
    %p173 = pnand %p171, %p172
    %p174 = pneg %p173
    // Predicated region
    $region33: #{classic_model_forward.3} parent=5 // pred_check
      _
    $region34: #{classic_model_forward.3} parent=5 // pred_check_branch
      %176 = sbr.rel (%p173) target = $region36
    $region35: #{classic_model_forward.3} parent=5 // pred_region
      %s177 = ssub.s32 %s10, 1
      %p178 = scmp.lt.s32.totalorder %s15, 1
      %s179 = scalar_select %p178, %s15, 1
      %s180 = smul.addr %s179, 2
      %s181 = smul.addr %s180, 8
      %s182 = scalar_lea.vmem %s0, %s181
      %p183 = pneg %p36
      %p184 = pneg %p33
      %p185 = scmp.lt.s32.totalorder %s15, 1
      %s186 = scalar_select %p185, %s15, 1
      %s187 = smul.addr %s186, 2
      %s188 = smul.addr %s187, 8
      %s189 = scalar_lea.vmem %s1, %s188
      %p190 = pneg %p62
      %p191 = pneg %p59
      %p192 = pneg %p83
      %p193 = pneg %p80
      %p194 = pneg %p104
      %p195 = pneg %p101
      %p196 = pneg %p130
      %p197 = pneg %p127
      %p198 = scmp.lt.s32.totalorder %s15, 1
      %s199 = scalar_select %p198, %s15, 1
      %s200 = smul.addr %s199, 2
      %s201 = smul.addr %s200, 8
      %s202 = scalar_lea.vmem %s4, %s201
      %p203 = scmp.lt.s32.totalorder %s15, 1
      %s204 = scalar_select %p203, %s15, 1
      %s205 = smul.addr %s204, 2
      %s206 = smul.addr %s205, 8
      %s207 = scalar_lea.vmem %s0, %s206
      %p208 = scmp.lt.s32.totalorder %s15, 1
      %s209 = scalar_select %p208, %s15, 1
      %s210 = smul.addr %s209, 2
      %s211 = smul.addr %s210, 8
      %s212 = scalar_lea.vmem %s1, %s211
      %p213 = scmp.lt.s32.totalorder %s15, 1
      %s214 = scalar_select %p213, %s15, 1
      %s215 = smul.addr %s214, 2
      %s216 = smul.addr %s215, 8
      %s217 = scalar_lea.vmem %s4, %s216
      %v218 = vld [vmem:[%s207] sm:$0xff]
      %v219 = vld [vmem:[%s207 + $0x8] sm:$0x3f]
      %v220 = vld [vmem:[%s2] sm:$0xff]
      %v221 = vld [vmem:[%s2 + $0x8] sm:$0xff]
      %v222 = vld [vmem:[%s2 + $0x10] sm:$0xff]
      %v223 = vld [vmem:[%s2 + $0x18] sm:$0xff]
      %v224 = vld [vmem:[%s2 + $0x20] sm:$0xff]
      %v225 = vld [vmem:[%s2 + $0x28] sm:$0xff]
      %v226 = vld [vmem:[%s2 + $0x30] sm:$0xff]
      %v227 = vld [vmem:[%s2 + $0x38] sm:$0xff]
      %v228 = vld [vmem:[%s2 + $0x40] sm:$0xff]
      %v229 = vld [vmem:[%s2 + $0x48] sm:$0xff]
      %v230 = vld [vmem:[%s2 + $0x50] sm:$0xff]
      %v231 = vld [vmem:[%s2 + $0x58] sm:$0xff]
      %v232 = vld [vmem:[%s2 + $0x60] sm:$0xff]
      %v233 = vld [vmem:[%s2 + $0x68] sm:$0xff]
      %v234 = vld [vmem:[%s2 + $0x70] sm:$0xff]
      %v235 = vld [vmem:[%s2 + $0x78] sm:$0xff]
      %v236 = vld [vmem:[%s2 + $0x80] sm:$0xff]
      %v237 = vld [vmem:[%s2 + $0x88] sm:$0xff]
      %v238 = vld [vmem:[%s2 + $0x90] sm:$0xff]
      %v239 = vld [vmem:[%s2 + $0x98] sm:$0xff]
      %v240 = vld [vmem:[%s2 + $0xa0] sm:$0xff]
      %v241 = vld [vmem:[%s2 + $0xa8] sm:$0xff]
      %v242 = vld [vmem:[%s2 + $0xb0] sm:$0xff]
      %v243 = vld [vmem:[%s2 + $0xb8] sm:$0xff]
      %v244 = vld [vmem:[%s2 + $0xc0] sm:$0xff]
      %v245 = vld [vmem:[%s2 + $0xc8] sm:$0xff]
      %v246 = vld [vmem:[%s2 + $0xd0] sm:$0xff]
      %v247 = vld [vmem:[%s2 + $0xd8] sm:$0xff]
      %v248 = vld [vmem:[%s2 + $0xe0] sm:$0xff]
      %v249 = vld [vmem:[%s2 + $0xe8] sm:$0xff]
      %v250 = vld [vmem:[%s2 + $0xf0] sm:$0xff]
      %v251 = vld [vmem:[%s2 + $0xf8] sm:$0xff]
      %v252 = vld [vmem:[%s212] sm:$0xff]
      %v253 = vld [vmem:[%s212 + $0x8] sm:$0x3f]
      %s254 = scalar_lea.vmem %s2, 256
      %v255 = vld [vmem:[%s254] sm:$0xff]
      %v256 = vld [vmem:[%s254 + $0x8] sm:$0xff]
      %v257 = vld [vmem:[%s254 + $0x10] sm:$0xff]
      %v258 = vld [vmem:[%s254 + $0x18] sm:$0xff]
      %v259 = vld [vmem:[%s254 + $0x20] sm:$0xff]
      %v260 = vld [vmem:[%s254 + $0x28] sm:$0xff]
      %v261 = vld [vmem:[%s254 + $0x30] sm:$0xff]
      %v262 = vld [vmem:[%s254 + $0x38] sm:$0xff]
      %v263 = vld [vmem:[%s254 + $0x40] sm:$0xff]
      %v264 = vld [vmem:[%s254 + $0x48] sm:$0xff]
      %v265 = vld [vmem:[%s254 + $0x50] sm:$0xff]
      %v266 = vld [vmem:[%s254 + $0x58] sm:$0xff]
      %v267 = vld [vmem:[%s254 + $0x60] sm:$0xff]
      %v268 = vld [vmem:[%s254 + $0x68] sm:$0xff]
      %v269 = vld [vmem:[%s254 + $0x70] sm:$0xff]
      %v270 = vld [vmem:[%s254 + $0x78] sm:$0xff]
      %v271 = vld [vmem:[%s254 + $0x80] sm:$0xff]
      %v272 = vld [vmem:[%s254 + $0x88] sm:$0xff]
      %v273 = vld [vmem:[%s254 + $0x90] sm:$0xff]
      %v274 = vld [vmem:[%s254 + $0x98] sm:$0xff]
      %v275 = vld [vmem:[%s254 + $0xa0] sm:$0xff]
      %v276 = vld [vmem:[%s254 + $0xa8] sm:$0xff]
      %v277 = vld [vmem:[%s254 + $0xb0] sm:$0xff]
      %v278 = vld [vmem:[%s254 + $0xb8] sm:$0xff]
      %v279 = vld [vmem:[%s254 + $0xc0] sm:$0xff]
      %v280 = vld [vmem:[%s254 + $0xc8] sm:$0xff]
      %v281 = vld [vmem:[%s254 + $0xd0] sm:$0xff]
      %v282 = vld [vmem:[%s254 + $0xd8] sm:$0xff]
      %v283 = vld [vmem:[%s254 + $0xe0] sm:$0xff]
      %v284 = vld [vmem:[%s254 + $0xe8] sm:$0xff]
      %v285 = vld [vmem:[%s254 + $0xf0] sm:$0xff]
      %v286 = vld [vmem:[%s254 + $0xf8] sm:$0xff]
      %287 = vmatpush.msra.mxu0 %v285
      %288 = vmatpush.msra.mxu0 %v283
      %289 = vmatpush.msra.mxu0 %v281
      %290 = vmatpush.msra.mxu0 %v279
      %291 = vmatpush.msra.mxu0 %v277
      %292 = vmatpush.msra.mxu0 %v275
      %293 = vmatpush.msra.mxu0 %v273
      %294 = vmatpush.msra.mxu0 %v271
      %295 = vmatpush.msra.mxu0 %v269
      %296 = vmatpush.msra.mxu0 %v267
      %297 = vmatpush.msra.mxu0 %v265
      %298 = vmatpush.msra.mxu0 %v263
      %299 = vmatpush.msra.mxu0 %v261
      %300 = vmatpush.msra.mxu0 %v259
      %301 = vmatpush.msra.mxu0 %v257
      %302 = vmatpush.msra.mxu0 %v255
      %303 = vmatmul.f32.gmra.mxu0 %v252
      %v304 = vpop.f32.mrf.mxu0
      %v305 = vadd.f32 0.0, %v304
      %306 = vmatmul.f32.gmra.mxu0 %v253
      %v307 = vpop.f32.mrf.mxu0
      %v308 = vadd.f32 0.0, %v307
      %309 = vdwg.mxu0
      %310 = vmatpush.msra.mxu0 %v286
      %311 = vmatpush.msra.mxu0 %v284
      %312 = vmatpush.msra.mxu0 %v282
      %313 = vmatpush.msra.mxu0 %v280
      %314 = vmatpush.msra.mxu0 %v278
      %315 = vmatpush.msra.mxu0 %v276
      %316 = vmatpush.msra.mxu0 %v274
      %317 = vmatpush.msra.mxu0 %v272
      %318 = vmatpush.msra.mxu0 %v270
      %319 = vmatpush.msra.mxu0 %v268
      %320 = vmatpush.msra.mxu0 %v266
      %321 = vmatpush.msra.mxu0 %v264
      %322 = vmatpush.msra.mxu0 %v262
      %323 = vmatpush.msra.mxu0 %v260
      %324 = vmatpush.msra.mxu0 %v258
      %325 = vmatpush.msra.mxu0 %v256
      %326 = vmatmul.f32.gmra.mxu0 %v252
      %v327 = vpop.f32.mrf.mxu0
      %v328 = vadd.f32 0.0, %v327
      %329 = vmatmul.f32.gmra.mxu0 %v253
      %v330 = vpop.f32.mrf.mxu0
      %v331 = vadd.f32 0.0, %v330
      %332 = vdwg.mxu0
      %333 = vmatpush.msra.mxu0 %v250
      %334 = vmatpush.msra.mxu0 %v248
      %335 = vmatpush.msra.mxu0 %v246
      %336 = vmatpush.msra.mxu0 %v244
      %337 = vmatpush.msra.mxu0 %v242
      %338 = vmatpush.msra.mxu0 %v240
      %339 = vmatpush.msra.mxu0 %v238
      %340 = vmatpush.msra.mxu0 %v236
      %341 = vmatpush.msra.mxu0 %v234
      %342 = vmatpush.msra.mxu0 %v232
      %343 = vmatpush.msra.mxu0 %v230
      %344 = vmatpush.msra.mxu0 %v228
      %345 = vmatpush.msra.mxu0 %v226
      %346 = vmatpush.msra.mxu0 %v224
      %347 = vmatpush.msra.mxu0 %v222
      %348 = vmatpush.msra.mxu0 %v220
      %349 = vmatmul.f32.gmra.mxu0 %v218
      %v350 = vpop.f32.mrf.mxu0
      %v351 = vadd.f32 %v305, %v350
      %352 = vmatmul.f32.gmra.mxu0 %v219
      %v353 = vpop.f32.mrf.mxu0
      %v354 = vadd.f32 %v308, %v353
      %355 = vdwg.mxu0
      %356 = vmatpush.msra.mxu0 %v251
      %357 = vmatpush.msra.mxu0 %v249
      %358 = vmatpush.msra.mxu0 %v247
      %359 = vmatpush.msra.mxu0 %v245
      %360 = vmatpush.msra.mxu0 %v243
      %361 = vmatpush.msra.mxu0 %v241
      %362 = vmatpush.msra.mxu0 %v239
      %363 = vmatpush.msra.mxu0 %v237
      %364 = vmatpush.msra.mxu0 %v235
      %365 = vmatpush.msra.mxu0 %v233
      %366 = vmatpush.msra.mxu0 %v231
      %367 = vmatpush.msra.mxu0 %v229
      %368 = vmatpush.msra.mxu0 %v227
      %369 = vmatpush.msra.mxu0 %v225
      %370 = vmatpush.msra.mxu0 %v223
      %371 = vmatpush.msra.mxu0 %v221
      %372 = vmatmul.f32.gmra.mxu0 %v218
      %v373 = vpop.f32.mrf.mxu0
      %v374 = vadd.f32 %v328, %v373
      %375 = vmatmul.f32.gmra.mxu0 %v219
      %v376 = vpop.f32.mrf.mxu0
      %v377 = vadd.f32 %v331, %v376
      %378 = vdwg.mxu0
      %v379 = vld [vmem:[%s207 + $0x1] sm:$0xff]
      %v380 = vld [vmem:[%s207 + $0x9] sm:$0x3f]
      %s381 = scalar_lea.vmem %s2, 512
      %v382 = vld [vmem:[%s381] sm:$0xff]
      %v383 = vld [vmem:[%s381 + $0x8] sm:$0xff]
      %v384 = vld [vmem:[%s381 + $0x10] sm:$0xff]
      %v385 = vld [vmem:[%s381 + $0x18] sm:$0xff]
      %v386 = vld [vmem:[%s381 + $0x20] sm:$0xff]
      %v387 = vld [vmem:[%s381 + $0x28] sm:$0xff]
      %v388 = vld [vmem:[%s381 + $0x30] sm:$0xff]
      %v389 = vld [vmem:[%s381 + $0x38] sm:$0xff]
      %v390 = vld [vmem:[%s381 + $0x40] sm:$0xff]
      %v391 = vld [vmem:[%s381 + $0x48] sm:$0xff]
      %v392 = vld [vmem:[%s381 + $0x50] sm:$0xff]
      %v393 = vld [vmem:[%s381 + $0x58] sm:$0xff]
      %v394 = vld [vmem:[%s381 + $0x60] sm:$0xff]
      %v395 = vld [vmem:[%s381 + $0x68] sm:$0xff]
      %v396 = vld [vmem:[%s381 + $0x70] sm:$0xff]
      %v397 = vld [vmem:[%s381 + $0x78] sm:$0xff]
      %v398 = vld [vmem:[%s381 + $0x80] sm:$0xff]
      %v399 = vld [vmem:[%s381 + $0x88] sm:$0xff]
      %v400 = vld [vmem:[%s381 + $0x90] sm:$0xff]
      %v401 = vld [vmem:[%s381 + $0x98] sm:$0xff]
      %v402 = vld [vmem:[%s381 + $0xa0] sm:$0xff]
      %v403 = vld [vmem:[%s381 + $0xa8] sm:$0xff]
      %v404 = vld [vmem:[%s381 + $0xb0] sm:$0xff]
      %v405 = vld [vmem:[%s381 + $0xb8] sm:$0xff]
      %v406 = vld [vmem:[%s381 + $0xc0] sm:$0xff]
      %v407 = vld [vmem:[%s381 + $0xc8] sm:$0xff]
      %v408 = vld [vmem:[%s381 + $0xd0] sm:$0xff]
      %v409 = vld [vmem:[%s381 + $0xd8] sm:$0xff]
      %v410 = vld [vmem:[%s381 + $0xe0] sm:$0xff]
      %v411 = vld [vmem:[%s381 + $0xe8] sm:$0xff]
      %v412 = vld [vmem:[%s381 + $0xf0] sm:$0xff]
      %v413 = vld [vmem:[%s381 + $0xf8] sm:$0xff]
      %414 = vmatpush.msra.mxu0 %v412
      %415 = vmatpush.msra.mxu0 %v410
      %416 = vmatpush.msra.mxu0 %v408
      %417 = vmatpush.msra.mxu0 %v406
      %418 = vmatpush.msra.mxu0 %v404
      %419 = vmatpush.msra.mxu0 %v402
      %420 = vmatpush.msra.mxu0 %v400
      %421 = vmatpush.msra.mxu0 %v398
      %422 = vmatpush.msra.mxu0 %v396
      %423 = vmatpush.msra.mxu0 %v394
      %424 = vmatpush.msra.mxu0 %v392
      %425 = vmatpush.msra.mxu0 %v390
      %426 = vmatpush.msra.mxu0 %v388
      %427 = vmatpush.msra.mxu0 %v386
      %428 = vmatpush.msra.mxu0 %v384
      %429 = vmatpush.msra.mxu0 %v382
      %430 = vmatmul.f32.gmra.mxu0 %v379
      %v431 = vpop.f32.mrf.mxu0
      %v432 = vadd.f32 0.0, %v431
      %433 = vmatmul.f32.gmra.mxu0 %v380
      %v434 = vpop.f32.mrf.mxu0
      %v435 = vadd.f32 0.0, %v434
      %436 = vdwg.mxu0
      %437 = vmatpush.msra.mxu0 %v413
      %438 = vmatpush.msra.mxu0 %v411
      %439 = vmatpush.msra.mxu0 %v409
      %440 = vmatpush.msra.mxu0 %v407
      %441 = vmatpush.msra.mxu0 %v405
      %442 = vmatpush.msra.mxu0 %v403
      %443 = vmatpush.msra.mxu0 %v401
      %444 = vmatpush.msra.mxu0 %v399
      %445 = vmatpush.msra.mxu0 %v397
      %446 = vmatpush.msra.mxu0 %v395
      %447 = vmatpush.msra.mxu0 %v393
      %448 = vmatpush.msra.mxu0 %v391
      %449 = vmatpush.msra.mxu0 %v389
      %450 = vmatpush.msra.mxu0 %v387
      %451 = vmatpush.msra.mxu0 %v385
      %452 = vmatpush.msra.mxu0 %v383
      %453 = vmatmul.f32.gmra.mxu0 %v379
      %v454 = vpop.f32.mrf.mxu0
      %v455 = vadd.f32 0.0, %v454
      %456 = vmatmul.f32.gmra.mxu0 %v380
      %v457 = vpop.f32.mrf.mxu0
      %v458 = vadd.f32 0.0, %v457
      %459 = vdwg.mxu0
      %v460 = vadd.f32 %v351, %v432
      %v461 = vadd.f32 %v374, %v455
      %v462 = vadd.f32 %v354, %v435
      %v463 = vadd.f32 %v377, %v458
      %v464 = vld [vmem:[%s212 + $0x1] sm:$0xff]
      %v465 = vld [vmem:[%s212 + $0x9] sm:$0x3f]
      %s466 = scalar_lea.vmem %s2, 768
      %v467 = vld [vmem:[%s466] sm:$0xff]
      %v468 = vld [vmem:[%s466 + $0x8] sm:$0xff]
      %v469 = vld [vmem:[%s466 + $0x10] sm:$0xff]
      %v470 = vld [vmem:[%s466 + $0x18] sm:$0xff]
      %v471 = vld [vmem:[%s466 + $0x20] sm:$0xff]
      %v472 = vld [vmem:[%s466 + $0x28] sm:$0xff]
      %v473 = vld [vmem:[%s466 + $0x30] sm:$0xff]
      %v474 = vld [vmem:[%s466 + $0x38] sm:$0xff]
      %v475 = vld [vmem:[%s466 + $0x40] sm:$0xff]
      %v476 = vld [vmem:[%s466 + $0x48] sm:$0xff]
      %v477 = vld [vmem:[%s466 + $0x50] sm:$0xff]
      %v478 = vld [vmem:[%s466 + $0x58] sm:$0xff]
      %v479 = vld [vmem:[%s466 + $0x60] sm:$0xff]
      %v480 = vld [vmem:[%s466 + $0x68] sm:$0xff]
      %v481 = vld [vmem:[%s466 + $0x70] sm:$0xff]
      %v482 = vld [vmem:[%s466 + $0x78] sm:$0xff]
      %v483 = vld [vmem:[%s466 + $0x80] sm:$0xff]
      %v484 = vld [vmem:[%s466 + $0x88] sm:$0xff]
      %v485 = vld [vmem:[%s466 + $0x90] sm:$0xff]
      %v486 = vld [vmem:[%s466 + $0x98] sm:$0xff]
      %v487 = vld [vmem:[%s466 + $0xa0] sm:$0xff]
      %v488 = vld [vmem:[%s466 + $0xa8] sm:$0xff]
      %v489 = vld [vmem:[%s466 + $0xb0] sm:$0xff]
      %v490 = vld [vmem:[%s466 + $0xb8] sm:$0xff]
      %v491 = vld [vmem:[%s466 + $0xc0] sm:$0xff]
      %v492 = vld [vmem:[%s466 + $0xc8] sm:$0xff]
      %v493 = vld [vmem:[%s466 + $0xd0] sm:$0xff]
      %v494 = vld [vmem:[%s466 + $0xd8] sm:$0xff]
      %v495 = vld [vmem:[%s466 + $0xe0] sm:$0xff]
      %v496 = vld [vmem:[%s466 + $0xe8] sm:$0xff]
      %v497 = vld [vmem:[%s466 + $0xf0] sm:$0xff]
      %v498 = vld [vmem:[%s466 + $0xf8] sm:$0xff]
      %499 = vmatpush.msra.mxu0 %v497
      %500 = vmatpush.msra.mxu0 %v495
      %501 = vmatpush.msra.mxu0 %v493
      %502 = vmatpush.msra.mxu0 %v491
      %503 = vmatpush.msra.mxu0 %v489
      %504 = vmatpush.msra.mxu0 %v487
      %505 = vmatpush.msra.mxu0 %v485
      %506 = vmatpush.msra.mxu0 %v483
      %507 = vmatpush.msra.mxu0 %v481
      %508 = vmatpush.msra.mxu0 %v479
      %509 = vmatpush.msra.mxu0 %v477
      %510 = vmatpush.msra.mxu0 %v475
      %511 = vmatpush.msra.mxu0 %v473
      %512 = vmatpush.msra.mxu0 %v471
      %513 = vmatpush.msra.mxu0 %v469
      %514 = vmatpush.msra.mxu0 %v467
      %515 = vmatmul.f32.gmra.mxu0 %v464
      %v516 = vpop.f32.mrf.mxu0
      %v517 = vadd.f32 0.0, %v516
      %518 = vmatmul.f32.gmra.mxu0 %v465
      %v519 = vpop.f32.mrf.mxu0
      %v520 = vadd.f32 0.0, %v519
      %521 = vdwg.mxu0
      %522 = vmatpush.msra.mxu0 %v498
      %523 = vmatpush.msra.mxu0 %v496
      %524 = vmatpush.msra.mxu0 %v494
      %525 = vmatpush.msra.mxu0 %v492
      %526 = vmatpush.msra.mxu0 %v490
      %527 = vmatpush.msra.mxu0 %v488
      %528 = vmatpush.msra.mxu0 %v486
      %529 = vmatpush.msra.mxu0 %v484
      %530 = vmatpush.msra.mxu0 %v482
      %531 = vmatpush.msra.mxu0 %v480
      %532 = vmatpush.msra.mxu0 %v478
      %533 = vmatpush.msra.mxu0 %v476
      %534 = vmatpush.msra.mxu0 %v474
      %535 = vmatpush.msra.mxu0 %v472
      %536 = vmatpush.msra.mxu0 %v470
      %537 = vmatpush.msra.mxu0 %v468
      %538 = vmatmul.f32.gmra.mxu0 %v464
      %v539 = vpop.f32.mrf.mxu0
      %v540 = vadd.f32 0.0, %v539
      %541 = vmatmul.f32.gmra.mxu0 %v465
      %v542 = vpop.f32.mrf.mxu0
      %v543 = vadd.f32 0.0, %v542
      %544 = vdwg.mxu0
      %v545 = vadd.f32 %v460, %v517
      %v546 = vadd.f32 %v461, %v540
      %v547 = vadd.f32 %v462, %v520
      %v548 = vadd.f32 %v463, %v543
      %v549 = vld [vmem:[%s207 + $0x2] sm:$0xff]
      %v550 = vld [vmem:[%s207 + $0xa] sm:$0x3f]
      %s551 = scalar_lea.vmem %s2, 1024
      %v552 = vld [vmem:[%s551] sm:$0xff]
      %v553 = vld [vmem:[%s551 + $0x8] sm:$0xff]
      %v554 = vld [vmem:[%s551 + $0x10] sm:$0xff]
      %v555 = vld [vmem:[%s551 + $0x18] sm:$0xff]
      %v556 = vld [vmem:[%s551 + $0x20] sm:$0xff]
      %v557 = vld [vmem:[%s551 + $0x28] sm:$0xff]
      %v558 = vld [vmem:[%s551 + $0x30] sm:$0xff]
      %v559 = vld [vmem:[%s551 + $0x38] sm:$0xff]
      %v560 = vld [vmem:[%s551 + $0x40] sm:$0xff]
      %v561 = vld [vmem:[%s551 + $0x48] sm:$0xff]
      %v562 = vld [vmem:[%s551 + $0x50] sm:$0xff]
      %v563 = vld [vmem:[%s551 + $0x58] sm:$0xff]
      %v564 = vld [vmem:[%s551 + $0x60] sm:$0xff]
      %v565 = vld [vmem:[%s551 + $0x68] sm:$0xff]
      %v566 = vld [vmem:[%s551 + $0x70] sm:$0xff]
      %v567 = vld [vmem:[%s551 + $0x78] sm:$0xff]
      %v568 = vld [vmem:[%s551 + $0x80] sm:$0xff]
      %v569 = vld [vmem:[%s551 + $0x88] sm:$0xff]
      %v570 = vld [vmem:[%s551 + $0x90] sm:$0xff]
      %v571 = vld [vmem:[%s551 + $0x98] sm:$0xff]
      %v572 = vld [vmem:[%s551 + $0xa0] sm:$0xff]
      %v573 = vld [vmem:[%s551 + $0xa8] sm:$0xff]
      %v574 = vld [vmem:[%s551 + $0xb0] sm:$0xff]
      %v575 = vld [vmem:[%s551 + $0xb8] sm:$0xff]
      %v576 = vld [vmem:[%s551 + $0xc0] sm:$0xff]
      %v577 = vld [vmem:[%s551 + $0xc8] sm:$0xff]
      %v578 = vld [vmem:[%s551 + $0xd0] sm:$0xff]
      %v579 = vld [vmem:[%s551 + $0xd8] sm:$0xff]
      %v580 = vld [vmem:[%s551 + $0xe0] sm:$0xff]
      %v581 = vld [vmem:[%s551 + $0xe8] sm:$0xff]
      %v582 = vld [vmem:[%s551 + $0xf0] sm:$0xff]
      %v583 = vld [vmem:[%s551 + $0xf8] sm:$0xff]
      %584 = vmatpush.msra.mxu0 %v582
      %585 = vmatpush.msra.mxu0 %v580
      %586 = vmatpush.msra.mxu0 %v578
      %587 = vmatpush.msra.mxu0 %v576
      %588 = vmatpush.msra.mxu0 %v574
      %589 = vmatpush.msra.mxu0 %v572
      %590 = vmatpush.msra.mxu0 %v570
      %591 = vmatpush.msra.mxu0 %v568
      %592 = vmatpush.msra.mxu0 %v566
      %593 = vmatpush.msra.mxu0 %v564
      %594 = vmatpush.msra.mxu0 %v562
      %595 = vmatpush.msra.mxu0 %v560
      %596 = vmatpush.msra.mxu0 %v558
      %597 = vmatpush.msra.mxu0 %v556
      %598 = vmatpush.msra.mxu0 %v554
      %599 = vmatpush.msra.mxu0 %v552
      %600 = vmatmul.f32.gmra.mxu0 %v549
      %v601 = vpop.f32.mrf.mxu0
      %v602 = vadd.f32 0.0, %v601
      %603 = vmatmul.f32.gmra.mxu0 %v550
      %v604 = vpop.f32.mrf.mxu0
      %v605 = vadd.f32 0.0, %v604
      %606 = vdwg.mxu0
      %607 = vmatpush.msra.mxu0 %v583
      %608 = vmatpush.msra.mxu0 %v581
      %609 = vmatpush.msra.mxu0 %v579
      %610 = vmatpush.msra.mxu0 %v577
      %611 = vmatpush.msra.mxu0 %v575
      %612 = vmatpush.msra.mxu0 %v573
      %613 = vmatpush.msra.mxu0 %v571
      %614 = vmatpush.msra.mxu0 %v569
      %615 = vmatpush.msra.mxu0 %v567
      %616 = vmatpush.msra.mxu0 %v565
      %617 = vmatpush.msra.mxu0 %v563
      %618 = vmatpush.msra.mxu0 %v561
      %619 = vmatpush.msra.mxu0 %v559
      %620 = vmatpush.msra.mxu0 %v557
      %621 = vmatpush.msra.mxu0 %v555
      %622 = vmatpush.msra.mxu0 %v553
      %623 = vmatmul.f32.gmra.mxu0 %v549
      %v624 = vpop.f32.mrf.mxu0
      %v625 = vadd.f32 0.0, %v624
      %626 = vmatmul.f32.gmra.mxu0 %v550
      %v627 = vpop.f32.mrf.mxu0
      %v628 = vadd.f32 0.0, %v627
      %629 = vdwg.mxu0
      %v630 = vadd.f32 %v545, %v602
      %v631 = vadd.f32 %v546, %v625
      %v632 = vadd.f32 %v547, %v605
      %v633 = vadd.f32 %v548, %v628
      %v634 = vmax.f32 %v630, %v631
      %v635 = vmax.f32 %v632, %v633
      %636 = vmatpush.msra.mxu0 %v285
      %637 = vmatpush.msra.mxu0 %v283
      %638 = vmatpush.msra.mxu0 %v281
      %639 = vmatpush.msra.mxu0 %v279
      %640 = vmatpush.msra.mxu0 %v277
      %641 = vmatpush.msra.mxu0 %v275
      %642 = vmatpush.msra.mxu0 %v273
      %643 = vmatpush.msra.mxu0 %v271
      %644 = vmatpush.msra.mxu0 %v269
      %645 = vmatpush.msra.mxu0 %v267
      %646 = vmatpush.msra.mxu0 %v265
      %647 = vmatpush.msra.mxu0 %v263
      %648 = vmatpush.msra.mxu0 %v261
      %649 = vmatpush.msra.mxu0 %v259
      %650 = vmatpush.msra.mxu0 %v257
      %651 = vmatpush.msra.mxu0 %v255
      %652 = vmatmul.f32.gmra.mxu0 %v379
      %v653 = vpop.f32.mrf.mxu0
      %v654 = vadd.f32 0.0, %v653
      %655 = vmatmul.f32.gmra.mxu0 %v380
      %v656 = vpop.f32.mrf.mxu0
      %v657 = vadd.f32 0.0, %v656
      %658 = vdwg.mxu0
      %659 = vmatpush.msra.mxu0 %v286
      %660 = vmatpush.msra.mxu0 %v284
      %661 = vmatpush.msra.mxu0 %v282
      %662 = vmatpush.msra.mxu0 %v280
      %663 = vmatpush.msra.mxu0 %v278
      %664 = vmatpush.msra.mxu0 %v276
      %665 = vmatpush.msra.mxu0 %v274
      %666 = vmatpush.msra.mxu0 %v272
      %667 = vmatpush.msra.mxu0 %v270
      %668 = vmatpush.msra.mxu0 %v268
      %669 = vmatpush.msra.mxu0 %v266
      %670 = vmatpush.msra.mxu0 %v264
      %671 = vmatpush.msra.mxu0 %v262
      %672 = vmatpush.msra.mxu0 %v260
      %673 = vmatpush.msra.mxu0 %v258
      %674 = vmatpush.msra.mxu0 %v256
      %675 = vmatmul.f32.gmra.mxu0 %v379
      %v676 = vpop.f32.mrf.mxu0
      %v677 = vadd.f32 0.0, %v676
      %678 = vmatmul.f32.gmra.mxu0 %v380
      %v679 = vpop.f32.mrf.mxu0
      %v680 = vadd.f32 0.0, %v679
      %681 = vdwg.mxu0
      %682 = vmatpush.msra.mxu0 %v250
      %683 = vmatpush.msra.mxu0 %v248
      %684 = vmatpush.msra.mxu0 %v246
      %685 = vmatpush.msra.mxu0 %v244
      %686 = vmatpush.msra.mxu0 %v242
      %687 = vmatpush.msra.mxu0 %v240
      %688 = vmatpush.msra.mxu0 %v238
      %689 = vmatpush.msra.mxu0 %v236
      %690 = vmatpush.msra.mxu0 %v234
      %691 = vmatpush.msra.mxu0 %v232
      %692 = vmatpush.msra.mxu0 %v230
      %693 = vmatpush.msra.mxu0 %v228
      %694 = vmatpush.msra.mxu0 %v226
      %695 = vmatpush.msra.mxu0 %v224
      %696 = vmatpush.msra.mxu0 %v222
      %697 = vmatpush.msra.mxu0 %v220
      %698 = vmatmul.f32.gmra.mxu0 %v252
      %v699 = vpop.f32.mrf.mxu0
      %v700 = vadd.f32 %v654, %v699
      %701 = vmatmul.f32.gmra.mxu0 %v253
      %v702 = vpop.f32.mrf.mxu0
      %v703 = vadd.f32 %v657, %v702
      %704 = vdwg.mxu0
      %705 = vmatpush.msra.mxu0 %v251
      %706 = vmatpush.msra.mxu0 %v249
      %707 = vmatpush.msra.mxu0 %v247
      %708 = vmatpush.msra.mxu0 %v245
      %709 = vmatpush.msra.mxu0 %v243
      %710 = vmatpush.msra.mxu0 %v241
      %711 = vmatpush.msra.mxu0 %v239
      %712 = vmatpush.msra.mxu0 %v237
      %713 = vmatpush.msra.mxu0 %v235
      %714 = vmatpush.msra.mxu0 %v233
      %715 = vmatpush.msra.mxu0 %v231
      %716 = vmatpush.msra.mxu0 %v229
      %717 = vmatpush.msra.mxu0 %v227
      %718 = vmatpush.msra.mxu0 %v225
      %719 = vmatpush.msra.mxu0 %v223
      %720 = vmatpush.msra.mxu0 %v221
      %721 = vmatmul.f32.gmra.mxu0 %v252
      %v722 = vpop.f32.mrf.mxu0
      %v723 = vadd.f32 %v677, %v722
      %724 = vmatmul.f32.gmra.mxu0 %v253
      %v725 = vpop.f32.mrf.mxu0
      %v726 = vadd.f32 %v680, %v725
      %727 = vdwg.mxu0
      %728 = vmatpush.msra.mxu0 %v412
      %729 = vmatpush.msra.mxu0 %v410
      %730 = vmatpush.msra.mxu0 %v408
      %731 = vmatpush.msra.mxu0 %v406
      %732 = vmatpush.msra.mxu0 %v404
      %733 = vmatpush.msra.mxu0 %v402
      %734 = vmatpush.msra.mxu0 %v400
      %735 = vmatpush.msra.mxu0 %v398
      %736 = vmatpush.msra.mxu0 %v396
      %737 = vmatpush.msra.mxu0 %v394
      %738 = vmatpush.msra.mxu0 %v392
      %739 = vmatpush.msra.mxu0 %v390
      %740 = vmatpush.msra.mxu0 %v388
      %741 = vmatpush.msra.mxu0 %v386
      %742 = vmatpush.msra.mxu0 %v384
      %743 = vmatpush.msra.mxu0 %v382
      %744 = vmatmul.f32.gmra.mxu0 %v464
      %v745 = vpop.f32.mrf.mxu0
      %v746 = vadd.f32 0.0, %v745
      %747 = vmatmul.f32.gmra.mxu0 %v465
      %v748 = vpop.f32.mrf.mxu0
      %v749 = vadd.f32 0.0, %v748
      %750 = vdwg.mxu0
      %751 = vmatpush.msra.mxu0 %v413
      %752 = vmatpush.msra.mxu0 %v411
      %753 = vmatpush.msra.mxu0 %v409
      %754 = vmatpush.msra.mxu0 %v407
      %755 = vmatpush.msra.mxu0 %v405
      %756 = vmatpush.msra.mxu0 %v403
      %757 = vmatpush.msra.mxu0 %v401
      %758 = vmatpush.msra.mxu0 %v399
      %759 = vmatpush.msra.mxu0 %v397
      %760 = vmatpush.msra.mxu0 %v395
      %761 = vmatpush.msra.mxu0 %v393
      %762 = vmatpush.msra.mxu0 %v391
      %763 = vmatpush.msra.mxu0 %v389
      %764 = vmatpush.msra.mxu0 %v387
      %765 = vmatpush.msra.mxu0 %v385
      %766 = vmatpush.msra.mxu0 %v383
      %767 = vmatmul.f32.gmra.mxu0 %v464
      %v768 = vpop.f32.mrf.mxu0
      %v769 = vadd.f32 0.0, %v768
      %770 = vmatmul.f32.gmra.mxu0 %v465
      %v771 = vpop.f32.mrf.mxu0
      %v772 = vadd.f32 0.0, %v771
      %773 = vdwg.mxu0
      %v774 = vadd.f32 %v700, %v746
      %v775 = vadd.f32 %v723, %v769
      %v776 = vadd.f32 %v703, %v749
      %v777 = vadd.f32 %v726, %v772
      %778 = vmatpush.msra.mxu0 %v497
      %779 = vmatpush.msra.mxu0 %v495
      %780 = vmatpush.msra.mxu0 %v493
      %781 = vmatpush.msra.mxu0 %v491
      %782 = vmatpush.msra.mxu0 %v489
      %783 = vmatpush.msra.mxu0 %v487
      %784 = vmatpush.msra.mxu0 %v485
      %785 = vmatpush.msra.mxu0 %v483
      %786 = vmatpush.msra.mxu0 %v481
      %787 = vmatpush.msra.mxu0 %v479
      %788 = vmatpush.msra.mxu0 %v477
      %789 = vmatpush.msra.mxu0 %v475
      %790 = vmatpush.msra.mxu0 %v473
      %791 = vmatpush.msra.mxu0 %v471
      %792 = vmatpush.msra.mxu0 %v469
      %793 = vmatpush.msra.mxu0 %v467
      %794 = vmatmul.f32.gmra.mxu0 %v549
      %v795 = vpop.f32.mrf.mxu0
      %v796 = vadd.f32 0.0, %v795
      %797 = vmatmul.f32.gmra.mxu0 %v550
      %v798 = vpop.f32.mrf.mxu0
      %v799 = vadd.f32 0.0, %v798
      %800 = vdwg.mxu0
      %801 = vmatpush.msra.mxu0 %v498
      %802 = vmatpush.msra.mxu0 %v496
      %803 = vmatpush.msra.mxu0 %v494
      %804 = vmatpush.msra.mxu0 %v492
      %805 = vmatpush.msra.mxu0 %v490
      %806 = vmatpush.msra.mxu0 %v488
      %807 = vmatpush.msra.mxu0 %v486
      %808 = vmatpush.msra.mxu0 %v484
      %809 = vmatpush.msra.mxu0 %v482
      %810 = vmatpush.msra.mxu0 %v480
      %811 = vmatpush.msra.mxu0 %v478
      %812 = vmatpush.msra.mxu0 %v476
      %813 = vmatpush.msra.mxu0 %v474
      %814 = vmatpush.msra.mxu0 %v472
      %815 = vmatpush.msra.mxu0 %v470
      %816 = vmatpush.msra.mxu0 %v468
      %817 = vmatmul.f32.gmra.mxu0 %v549
      %v818 = vpop.f32.mrf.mxu0
      %v819 = vadd.f32 0.0, %v818
      %820 = vmatmul.f32.gmra.mxu0 %v550
      %v821 = vpop.f32.mrf.mxu0
      %v822 = vadd.f32 0.0, %v821
      %823 = vdwg.mxu0
      %v824 = vadd.f32 %v774, %v796
      %v825 = vadd.f32 %v775, %v819
      %v826 = vadd.f32 %v776, %v799
      %v827 = vadd.f32 %v777, %v822
      %v828 = vld [vmem:[%s212 + $0x2] sm:$0xff]
      %v829 = vld [vmem:[%s212 + $0xa] sm:$0x3f]
      %830 = vmatpush.msra.mxu0 %v582
      %831 = vmatpush.msra.mxu0 %v580
      %832 = vmatpush.msra.mxu0 %v578
      %833 = vmatpush.msra.mxu0 %v576
      %834 = vmatpush.msra.mxu0 %v574
      %835 = vmatpush.msra.mxu0 %v572
      %836 = vmatpush.msra.mxu0 %v570
      %837 = vmatpush.msra.mxu0 %v568
      %838 = vmatpush.msra.mxu0 %v566
      %839 = vmatpush.msra.mxu0 %v564
      %840 = vmatpush.msra.mxu0 %v562
      %841 = vmatpush.msra.mxu0 %v560
      %842 = vmatpush.msra.mxu0 %v558
      %843 = vmatpush.msra.mxu0 %v556
      %844 = vmatpush.msra.mxu0 %v554
      %845 = vmatpush.msra.mxu0 %v552
      %846 = vmatmul.f32.gmra.mxu0 %v828
      %v847 = vpop.f32.mrf.mxu0
      %v848 = vadd.f32 0.0, %v847
      %849 = vmatmul.f32.gmra.mxu0 %v829
      %v850 = vpop.f32.mrf.mxu0
      %v851 = vadd.f32 0.0, %v850
      %852 = vdwg.mxu0
      %853 = vmatpush.msra.mxu0 %v583
      %854 = vmatpush.msra.mxu0 %v581
      %855 = vmatpush.msra.mxu0 %v579
      %856 = vmatpush.msra.mxu0 %v577
      %857 = vmatpush.msra.mxu0 %v575
      %858 = vmatpush.msra.mxu0 %v573
      %859 = vmatpush.msra.mxu0 %v571
      %860 = vmatpush.msra.mxu0 %v569
      %861 = vmatpush.msra.mxu0 %v567
      %862 = vmatpush.msra.mxu0 %v565
      %863 = vmatpush.msra.mxu0 %v563
      %864 = vmatpush.msra.mxu0 %v561
      %865 = vmatpush.msra.mxu0 %v559
      %866 = vmatpush.msra.mxu0 %v557
      %867 = vmatpush.msra.mxu0 %v555
      %868 = vmatpush.msra.mxu0 %v553
      %869 = vmatmul.f32.gmra.mxu0 %v828
      %v870 = vpop.f32.mrf.mxu0
      %v871 = vadd.f32 0.0, %v870
      %872 = vmatmul.f32.gmra.mxu0 %v829
      %v873 = vpop.f32.mrf.mxu0
      %v874 = vadd.f32 0.0, %v873
      %875 = vdwg.mxu0
      %v876 = vadd.f32 %v824, %v848
      %v877 = vadd.f32 %v825, %v871
      %v878 = vadd.f32 %v826, %v851
      %v879 = vadd.f32 %v827, %v874
      %v880 = vmax.f32 %v876, %v877
      %v881 = vmax.f32 %v878, %v879
      %v882 = vmax.f32 %v634, %v880
      %v883 = vmax.f32 %v635, %v881
      %v884 = vld [vmem:[%s3] sm:$0x1]
      %v886 = vperm.slane %v884, 0
      %v888 = vadd.f32 %v882, %v886
      %v889 = vadd.f32 %v883, %v886
      %v890 = vmax.f32 %v888, 0.0
      %v891 = vmax.f32 %v889, 0.0
      %892 = vst [vmem:[%s217] sm:$0xff] %v890
      %893 = vst [vmem:[%s217 + $0x8] sm:$0x3f] %v891
      %p894 = scmp.lt.s32.totalorder %s15, 1
      %s895 = scalar_select %p894, %s15, 1
      %s896 = smul.addr %s895, 2
      %s897 = smul.addr %s896, 8
      %s898 = scalar_lea.vmem %s4, %s897
      // Predicated region
      $region37: #{classic_model_forward.3} parent=35 // pred_check
        %p899 = pneg %p127
      $region38: #{classic_model_forward.3} parent=35 // pred_check_branch
        %901 = sbr.rel (%p899) target = $region40
      $region39: #{classic_model_forward.3} parent=35 // pred_region
        _
      $region40: #{classic_model_forward.3} parent=35 // pred_fallthru
        _
    $region36: #{classic_model_forward.3} parent=5 // pred_fallthru
      _
    %p902 = scmp.le.s32.totalorder 2, %s10
    // Predicated region
    $region41: #{classic_model_forward.3} parent=5 // pred_check
      %p903 = pneg %p902
    $region42: #{classic_model_forward.3} parent=5 // pred_check_branch
      %905 = sbr.rel (%p903) target = $region44
    $region43: #{classic_model_forward.3} parent=5 // pred_region
      %s906 = ssub.s32 %s10, 2
      // Predicated region
      $region45: #{classic_model_forward.3} parent=43 // pred_check
        %p907 = pneg %p133
      $region46: #{classic_model_forward.3} parent=43 // pred_check_branch
        %909 = sbr.rel (%p907) target = $region48
      $region47: #{classic_model_forward.3} parent=43 // pred_region
        %p910 = scmp.lt.s32.totalorder %s16, 1
        %s911 = scalar_select %p910, %s16, 1
        %s912 = smul.addr %s911, 2
        %s913 = smul.addr %s912, 8
        %s914 = scalar_lea.vmem %s4, %s913
      $region48: #{classic_model_forward.3} parent=43 // pred_fallthru
        _
    $region44: #{classic_model_forward.3} parent=5 // pred_fallthru
      _
  $region6: #{classic_model_forward.3} parent=0 // loop_footer
    %s14 = sadd.s32 1, %s10
  $region7: #{classic_model_forward.3} parent=0 // loop_footer_branch
    %9 = sbr.rel target = $region3
  $region8: #{classic_model_forward.3} parent=0 // loop_exit
    _

// kernel: tile.18
$region0: #{tile.18}
  #allocation0 [shape = 's32[1]{0}', space=sflag, size = 0x4, scoped, tag = 'scoped memory for tile.18']
  %s0 = inlined_call_operand.vmem [shape: f32[8], index: 0, kind: input, shape index: {}]
  %s1 = inlined_call_operand.vmem [shape: f32[5,8], index: 1, kind: output, shape index: {}]
  // Predicated region
  $region2: #{tile.18} parent=0 // pred_check
    _
  $region3: #{tile.18} parent=0 // pred_check_branch
    %3 = sbr.rel (0) target = $region5
  $region4: #{tile.18} parent=0 // pred_region
    _
  $region5: #{tile.18} parent=0 // pred_fallthru
    _
  %v4 = vld [vmem:[%s0] ss:$0 sm:$0xff]
  %5 = vst [vmem:[%s1] sm:$0xff] %v4

// kernel: tile.19
$region0: #{tile.19}
  %s0 = inlined_call_operand.vmem [shape: f32[5,8], index: 0, kind: input, shape index: {}]
  %s1 = inlined_call_operand.vmem [shape: f32[40], index: 1, kind: output, shape index: {}]
  $region1: #{tile.19} parent=0
    #allocation0 [shape = 'u8[4096]{0}', space=vmem, size = 0x1000, scoped, tag = 'scoped mem for output reshape']
    %v2 = vld [vmem:[%s0] sm:$0x1]
    %vm3 = vcmask 64512
    %4 = vst.msk [vmem:[#allocation0] sm:$0x1] %vm3, %v2
    %s5 = scalar_lea.vmem %s0, 4
    %v6 = vld [vmem:[%s5] sm:$0x1]
    %7 = vrot.lane.b32.xlu0 %v6, 32
    %v8 = vpop.permute.xlu0 %7
    %vm9 = vcmask 326912
    %10 = vst.msk [vmem:[#allocation0] sm:$0x1] %vm9, %v8
    %s11 = scalar_lea.vmem %s0, 3
    %v12 = vld [vmem:[%s11] sm:$0x1]
    %13 = vrot.lane.b32.xlu0 %v12, 24
    %v14 = vpop.permute.xlu0 %13
    %vm15 = vcmask 261312
    %16 = vst.msk [vmem:[#allocation0] sm:$0x1] %vm15, %v14
    %s17 = scalar_lea.vmem %s0, 2
    %v18 = vld [vmem:[%s17] sm:$0x1]
    %19 = vrot.lane.b32.xlu0 %v18, 16
    %v20 = vpop.permute.xlu0 %19
    %vm21 = vcmask 195712
    %22 = vst.msk [vmem:[#allocation0] sm:$0x1] %vm21, %v20
    %s23 = scalar_lea.vmem %s0, 1
    %v24 = vld [vmem:[%s23] sm:$0x1]
    %25 = vrot.lane.b32.xlu0 %v24, 8
    %v26 = vpop.permute.xlu0 %25
    %vm27 = vcmask 130112
    %28 = vst.msk [vmem:[#allocation0] sm:$0x1] %vm27, %v26
    %s30 = ssub.s32 2, 1
    %v31 = vld [vmem:[#allocation0] sm:%s30]
    %s33 = ssub.s32 2, 1
    %34 = vst [vmem:[%s1] sm:%s33] %v31

// kernel: classic_model_forward.4
$region0: #{classic_model_forward.4}
  #allocation0 [shape = 'u32[]', space=smem, size = 0x4, offset = 0x4, fixed_abs, tag = 'smem constant byte address 0x4 - core index']
  #allocation1 [shape = 'u32[72,128]{1,0:T(1,128)}', space=vmem, size = 0x9000, scoped, tag = 'internal scratch']
  %s0 = inlined_call_operand.vmem [shape: f32[2,7,128], index: 0, kind: input, shape index: {}]
  %s1 = inlined_call_operand.vmem [shape: f32[2,7,128], index: 1, kind: input, shape index: {}]
  %s2 = inlined_call_operand.vmem [shape: f32[5,128,256], index: 2, kind: input, shape index: {}]
  %s3 = inlined_call_operand.vmem [shape: f32[1,128], index: 3, kind: input, shape index: {}]
  %s4 = inlined_call_operand.vmem [shape: f32[2,5,128], index: 4, kind: output, shape index: {}]
  %s5 = sld [smem:[#allocation0]]
  $region49: #{classic_model_forward.4} parent=0
    _
  %s7 = ssub.s32 1, %s5
  %s8 = scalar_select 0, %s7, %s5
  loop: start=0, step=1, limit=4
  $region2: #{classic_model_forward.4} parent=0 // loop_pre_header
    _
  $region3: #{classic_model_forward.4} parent=0 // loop_header
    %s10 = sphi 0, %s14
    %p11 = scmp.ge.s32.totalorder %s10, 4
    %s20 = sphi 0, %s22
    %s23 = sphi 0, %s20
    %s24 = sphi 0, %s23
    %s40 = sphi 0, %s24
    %s46 = sphi 0, %s48
    %s49 = sphi 0, %s46
    %s50 = sphi 0, %s49
    %s66 = sphi 0, %s50
    %s70 = sphi 0, %s70
    %s72 = sphi 0, %s70
    %s73 = sphi 0, %s72
    %s87 = sphi 0, %s73
    %s91 = sphi 0, %s91
    %s93 = sphi 0, %s91
    %s94 = sphi 0, %s93
    %s108 = sphi 0, %s94
    %s114 = sphi 0, %s116
    %s117 = sphi 0, %s114
    %s118 = sphi 0, %s117
    %s134 = sphi 0, %s118
  $region4: #{classic_model_forward.4} parent=0 // loop_header_branch
    %13 = sbr.rel (%p11) target = $region8
  $region5: #{classic_model_forward.4} parent=0 // loop_body
    %s15 = ssub.s32 %s10, 1
    %s16 = ssub.s32 %s10, 2
    %s17 = sadd.s32 %s10, 1
    %s18 = ssub.s32 %s10, %s17
    %p19 = scmp.eq.s32.totalorder %s18, 0
    %s21 = sadd.s32 %s20, 1
    %s22 = scalar_select %p19, %s20, %s21
    %p25 = pneg %p19
    %p26 = scmp.eq.s32.totalorder %s10, 1
    %p27 = por %p25, %p26
    %p28 = scmp.ne.s32.totalorder %s20, %s23
    %p29 = scmp.eq.s32.totalorder %s10, 0
    %p30 = por %p28, %p29
    %p31 = scmp.ne.s32.totalorder %s20, %s23
    %p32 = scmp.eq.s32.totalorder %s15, 1
    %p33 = por %p31, %p32
    %p34 = scmp.ne.s32.totalorder %s23, %s24
    %p35 = scmp.eq.s32.totalorder %s15, 0
    %p36 = por %p34, %p35
    %p37 = scmp.ne.s32.totalorder %s23, %s24
    %p38 = scmp.eq.s32.totalorder %s16, 1
    %p39 = por %p37, %p38
    %p41 = scmp.ne.s32.totalorder %s24, %s40
    %p42 = scmp.eq.s32.totalorder %s16, 0
    %p43 = por %p41, %p42
    %s44 = ssub.s32 %s10, %s17
    %p45 = scmp.eq.s32.totalorder %s44, 0
    %s47 = sadd.s32 %s46, 1
    %s48 = scalar_select %p45, %s46, %s47
    %p51 = pneg %p45
    %p52 = scmp.eq.s32.totalorder %s10, 1
    %p53 = por %p51, %p52
    %p54 = scmp.ne.s32.totalorder %s46, %s49
    %p55 = scmp.eq.s32.totalorder %s10, 0
    %p56 = por %p54, %p55
    %p57 = scmp.ne.s32.totalorder %s46, %s49
    %p58 = scmp.eq.s32.totalorder %s15, 1
    %p59 = por %p57, %p58
    %p60 = scmp.ne.s32.totalorder %s49, %s50
    %p61 = scmp.eq.s32.totalorder %s15, 0
    %p62 = por %p60, %p61
    %p63 = scmp.ne.s32.totalorder %s49, %s50
    %p64 = scmp.eq.s32.totalorder %s16, 1
    %p65 = por %p63, %p64
    %p67 = scmp.ne.s32.totalorder %s50, %s66
    %p68 = scmp.eq.s32.totalorder %s16, 0
    %p69 = por %p67, %p68
    %s71 = sadd.s32 %s70, 1
    %p74 = scmp.eq.s32.totalorder %s10, 1
    %p75 = scmp.ne.s32.totalorder %s70, %s72
    %p76 = scmp.eq.s32.totalorder %s10, 0
    %p77 = por %p75, %p76
    %p78 = scmp.ne.s32.totalorder %s70, %s72
    %p79 = scmp.eq.s32.totalorder %s15, 1
    %p80 = por %p78, %p79
    %p81 = scmp.ne.s32.totalorder %s72, %s73
    %p82 = scmp.eq.s32.totalorder %s15, 0
    %p83 = por %p81, %p82
    %p84 = scmp.ne.s32.totalorder %s72, %s73
    %p85 = scmp.eq.s32.totalorder %s16, 1
    %p86 = por %p84, %p85
    %p88 = scmp.ne.s32.totalorder %s73, %s87
    %p89 = scmp.eq.s32.totalorder %s16, 0
    %p90 = por %p88, %p89
    %s92 = sadd.s32 %s91, 1
    %p95 = scmp.eq.s32.totalorder %s10, 1
    %p96 = scmp.ne.s32.totalorder %s91, %s93
    %p97 = scmp.eq.s32.totalorder %s10, 0
    %p98 = por %p96, %p97
    %p99 = scmp.ne.s32.totalorder %s91, %s93
    %p100 = scmp.eq.s32.totalorder %s15, 1
    %p101 = por %p99, %p100
    %p102 = scmp.ne.s32.totalorder %s93, %s94
    %p103 = scmp.eq.s32.totalorder %s15, 0
    %p104 = por %p102, %p103
    %p105 = scmp.ne.s32.totalorder %s93, %s94
    %p106 = scmp.eq.s32.totalorder %s16, 1
    %p107 = por %p105, %p106
    %p109 = scmp.ne.s32.totalorder %s94, %s108
    %p110 = scmp.eq.s32.totalorder %s16, 0
    %p111 = por %p109, %p110
    %s112 = ssub.s32 %s10, %s17
    %p113 = scmp.eq.s32.totalorder %s112, 0
    %s115 = sadd.s32 %s114, 1
    %s116 = scalar_select %p113, %s114, %s115
    %p119 = pneg %p113
    %p120 = scmp.eq.s32.totalorder %s10, 1
    %p121 = por %p119, %p120
    %p122 = scmp.ne.s32.totalorder %s114, %s117
    %p123 = scmp.eq.s32.totalorder %s10, 0
    %p124 = por %p122, %p123
    %p125 = scmp.ne.s32.totalorder %s114, %s117
    %p126 = scmp.eq.s32.totalorder %s15, 1
    %p127 = por %p125, %p126
    %p128 = scmp.ne.s32.totalorder %s117, %s118
    %p129 = scmp.eq.s32.totalorder %s15, 0
    %p130 = por %p128, %p129
    %p131 = scmp.ne.s32.totalorder %s117, %s118
    %p132 = scmp.eq.s32.totalorder %s16, 1
    %p133 = por %p131, %p132
    %p135 = scmp.ne.s32.totalorder %s118, %s134
    %p136 = scmp.eq.s32.totalorder %s16, 0
    %p137 = por %p135, %p136
    %p138 = scmp.le.s32.totalorder 1, %s10
    %p139 = scmp.lt.s32.totalorder %s10, 3
    %p140 = pnand %p138, %p139
    %p141 = pneg %p140
    // Predicated region
    $region9: #{classic_model_forward.4} parent=5 // pred_check
      _
    $region10: #{classic_model_forward.4} parent=5 // pred_check_branch
      %143 = sbr.rel (%p140) target = $region12
    $region11: #{classic_model_forward.4} parent=5 // pred_region
      %s144 = ssub.s32 %s10, 1
      // Predicated region
      $region13: #{classic_model_forward.4} parent=11 // pred_check
        %p145 = pneg %p83
      $region14: #{classic_model_forward.4} parent=11 // pred_check_branch
        %147 = sbr.rel (%p145) target = $region16
      $region15: #{classic_model_forward.4} parent=11 // pred_region
        _
      $region16: #{classic_model_forward.4} parent=11 // pred_fallthru
        _
      // Predicated region
      $region17: #{classic_model_forward.4} parent=11 // pred_check
        %p148 = pneg %p104
      $region18: #{classic_model_forward.4} parent=11 // pred_check_branch
        %150 = sbr.rel (%p148) target = $region20
      $region19: #{classic_model_forward.4} parent=11 // pred_region
        _
      $region20: #{classic_model_forward.4} parent=11 // pred_fallthru
        _
    $region12: #{classic_model_forward.4} parent=5 // pred_fallthru
      _
    %p151 = scmp.lt.s32.totalorder %s10, 2
    // Predicated region
    $region21: #{classic_model_forward.4} parent=5 // pred_check
      %p152 = pneg %p151
    $region22: #{classic_model_forward.4} parent=5 // pred_check_branch
      %154 = sbr.rel (%p152) target = $region24
    $region23: #{classic_model_forward.4} parent=5 // pred_region
      // Predicated region
      $region25: #{classic_model_forward.4} parent=23 // pred_check
        %p155 = pneg %p30
      $region26: #{classic_model_forward.4} parent=23 // pred_check_branch
        %157 = sbr.rel (%p155) target = $region28
      $region27: #{classic_model_forward.4} parent=23 // pred_region
        %p158 = scmp.lt.s32.totalorder %s10, 1
        %s159 = scalar_select %p158, %s10, 1
        %s160 = smul.addr %s159, 8
        %s161 = scalar_lea.vmem %s0, %s160
      $region28: #{classic_model_forward.4} parent=23 // pred_fallthru
        _
      // Predicated region
      $region29: #{classic_model_forward.4} parent=23 // pred_check
        %p162 = pneg %p56
      $region30: #{classic_model_forward.4} parent=23 // pred_check_branch
        %164 = sbr.rel (%p162) target = $region32
      $region31: #{classic_model_forward.4} parent=23 // pred_region
        %p165 = scmp.lt.s32.totalorder %s10, 1
        %s166 = scalar_select %p165, %s10, 1
        %s167 = smul.addr %s166, 8
        %s168 = scalar_lea.vmem %s1, %s167
      $region32: #{classic_model_forward.4} parent=23 // pred_fallthru
        _
    $region24: #{classic_model_forward.4} parent=5 // pred_fallthru
      _
    %p169 = scmp.le.s32.totalorder 1, %s10
    %p170 = scmp.lt.s32.totalorder %s10, 3
    %p171 = pnand %p169, %p170
    %p172 = pneg %p171
    // Predicated region
    $region33: #{classic_model_forward.4} parent=5 // pred_check
      _
    $region34: #{classic_model_forward.4} parent=5 // pred_check_branch
      %174 = sbr.rel (%p171) target = $region36
    $region35: #{classic_model_forward.4} parent=5 // pred_region
      %s175 = ssub.s32 %s10, 1
      %p176 = scmp.lt.s32.totalorder %s15, 1
      %s177 = scalar_select %p176, %s15, 1
      %s178 = smul.addr %s177, 8
      %s179 = scalar_lea.vmem %s0, %s178
      %p180 = pneg %p36
      %p181 = pneg %p33
      %p182 = scmp.lt.s32.totalorder %s15, 1
      %s183 = scalar_select %p182, %s15, 1
      %s184 = smul.addr %s183, 8
      %s185 = scalar_lea.vmem %s1, %s184
      %p186 = pneg %p62
      %p187 = pneg %p59
      %p188 = pneg %p83
      %p189 = pneg %p80
      %p190 = pneg %p104
      %p191 = pneg %p101
      %p192 = pneg %p130
      %p193 = pneg %p127
      %p194 = scmp.lt.s32.totalorder %s15, 1
      %s195 = scalar_select %p194, %s15, 1
      %s196 = smul.addr %s195, 8
      %s197 = scalar_lea.vmem %s4, %s196
      %p198 = scmp.lt.s32.totalorder %s15, 1
      %s199 = scalar_select %p198, %s15, 1
      %s200 = smul.addr %s199, 8
      %s201 = scalar_lea.vmem %s0, %s200
      %p202 = scmp.lt.s32.totalorder %s15, 1
      %s203 = scalar_select %p202, %s15, 1
      %s204 = smul.addr %s203, 8
      %s205 = scalar_lea.vmem %s1, %s204
      %p206 = scmp.lt.s32.totalorder %s15, 1
      %s207 = scalar_select %p206, %s15, 1
      %s208 = smul.addr %s207, 8
      %s209 = scalar_lea.vmem %s4, %s208
      %v210 = vld [vmem:[%s201] sm:$0x1f]
      %v211 = vld [vmem:[%s2] sm:$0xff]
      %v212 = vld [vmem:[%s2 + $0x8] sm:$0xff]
      %v213 = vld [vmem:[%s2 + $0x10] sm:$0xff]
      %v214 = vld [vmem:[%s2 + $0x18] sm:$0xff]
      %v215 = vld [vmem:[%s2 + $0x20] sm:$0xff]
      %v216 = vld [vmem:[%s2 + $0x28] sm:$0xff]
      %v217 = vld [vmem:[%s2 + $0x30] sm:$0xff]
      %v218 = vld [vmem:[%s2 + $0x38] sm:$0xff]
      %v219 = vld [vmem:[%s2 + $0x40] sm:$0xff]
      %v220 = vld [vmem:[%s2 + $0x48] sm:$0xff]
      %v221 = vld [vmem:[%s2 + $0x50] sm:$0xff]
      %v222 = vld [vmem:[%s2 + $0x58] sm:$0xff]
      %v223 = vld [vmem:[%s2 + $0x60] sm:$0xff]
      %v224 = vld [vmem:[%s2 + $0x68] sm:$0xff]
      %v225 = vld [vmem:[%s2 + $0x70] sm:$0xff]
      %v226 = vld [vmem:[%s2 + $0x78] sm:$0xff]
      %v227 = vld [vmem:[%s2 + $0x80] sm:$0xff]
      %v228 = vld [vmem:[%s2 + $0x88] sm:$0xff]
      %v229 = vld [vmem:[%s2 + $0x90] sm:$0xff]
      %v230 = vld [vmem:[%s2 + $0x98] sm:$0xff]
      %v231 = vld [vmem:[%s2 + $0xa0] sm:$0xff]
      %v232 = vld [vmem:[%s2 + $0xa8] sm:$0xff]
      %v233 = vld [vmem:[%s2 + $0xb0] sm:$0xff]
      %v234 = vld [vmem:[%s2 + $0xb8] sm:$0xff]
      %v235 = vld [vmem:[%s2 + $0xc0] sm:$0xff]
      %v236 = vld [vmem:[%s2 + $0xc8] sm:$0xff]
      %v237 = vld [vmem:[%s2 + $0xd0] sm:$0xff]
      %v238 = vld [vmem:[%s2 + $0xd8] sm:$0xff]
      %v239 = vld [vmem:[%s2 + $0xe0] sm:$0xff]
      %v240 = vld [vmem:[%s2 + $0xe8] sm:$0xff]
      %v241 = vld [vmem:[%s2 + $0xf0] sm:$0xff]
      %v242 = vld [vmem:[%s2 + $0xf8] sm:$0xff]
      %v243 = vld [vmem:[%s205] sm:$0x1f]
      %s244 = scalar_lea.vmem %s2, 256
      %v245 = vld [vmem:[%s244] sm:$0xff]
      %v246 = vld [vmem:[%s244 + $0x8] sm:$0xff]
      %v247 = vld [vmem:[%s244 + $0x10] sm:$0xff]
      %v248 = vld [vmem:[%s244 + $0x18] sm:$0xff]
      %v249 = vld [vmem:[%s244 + $0x20] sm:$0xff]
      %v250 = vld [vmem:[%s244 + $0x28] sm:$0xff]
      %v251 = vld [vmem:[%s244 + $0x30] sm:$0xff]
      %v252 = vld [vmem:[%s244 + $0x38] sm:$0xff]
      %v253 = vld [vmem:[%s244 + $0x40] sm:$0xff]
      %v254 = vld [vmem:[%s244 + $0x48] sm:$0xff]
      %v255 = vld [vmem:[%s244 + $0x50] sm:$0xff]
      %v256 = vld [vmem:[%s244 + $0x58] sm:$0xff]
      %v257 = vld [vmem:[%s244 + $0x60] sm:$0xff]
      %v258 = vld [vmem:[%s244 + $0x68] sm:$0xff]
      %v259 = vld [vmem:[%s244 + $0x70] sm:$0xff]
      %v260 = vld [vmem:[%s244 + $0x78] sm:$0xff]
      %v261 = vld [vmem:[%s244 + $0x80] sm:$0xff]
      %v262 = vld [vmem:[%s244 + $0x88] sm:$0xff]
      %v263 = vld [vmem:[%s244 + $0x90] sm:$0xff]
      %v264 = vld [vmem:[%s244 + $0x98] sm:$0xff]
      %v265 = vld [vmem:[%s244 + $0xa0] sm:$0xff]
      %v266 = vld [vmem:[%s244 + $0xa8] sm:$0xff]
      %v267 = vld [vmem:[%s244 + $0xb0] sm:$0xff]
      %v268 = vld [vmem:[%s244 + $0xb8] sm:$0xff]
      %v269 = vld [vmem:[%s244 + $0xc0] sm:$0xff]
      %v270 = vld [vmem:[%s244 + $0xc8] sm:$0xff]
      %v271 = vld [vmem:[%s244 + $0xd0] sm:$0xff]
      %v272 = vld [vmem:[%s244 + $0xd8] sm:$0xff]
      %v273 = vld [vmem:[%s244 + $0xe0] sm:$0xff]
      %v274 = vld [vmem:[%s244 + $0xe8] sm:$0xff]
      %v275 = vld [vmem:[%s244 + $0xf0] sm:$0xff]
      %v276 = vld [vmem:[%s244 + $0xf8] sm:$0xff]
      %277 = vmatpush.msra.mxu0 %v275
      %278 = vmatpush.msra.mxu0 %v273
      %279 = vmatpush.msra.mxu0 %v271
      %280 = vmatpush.msra.mxu0 %v269
      %281 = vmatpush.msra.mxu0 %v267
      %282 = vmatpush.msra.mxu0 %v265
      %283 = vmatpush.msra.mxu0 %v263
      %284 = vmatpush.msra.mxu0 %v261
      %285 = vmatpush.msra.mxu0 %v259
      %286 = vmatpush.msra.mxu0 %v257
      %287 = vmatpush.msra.mxu0 %v255
      %288 = vmatpush.msra.mxu0 %v253
      %289 = vmatpush.msra.mxu0 %v251
      %290 = vmatpush.msra.mxu0 %v249
      %291 = vmatpush.msra.mxu0 %v247
      %292 = vmatpush.msra.mxu0 %v245
      %293 = vmatmul.f32.gmra.mxu0 %v243
      %v294 = vpop.f32.mrf.mxu0
      %v295 = vadd.f32 0.0, %v294
      %296 = vdwg.mxu0
      %297 = vmatpush.msra.mxu0 %v276
      %298 = vmatpush.msra.mxu0 %v274
      %299 = vmatpush.msra.mxu0 %v272
      %300 = vmatpush.msra.mxu0 %v270
      %301 = vmatpush.msra.mxu0 %v268
      %302 = vmatpush.msra.mxu0 %v266
      %303 = vmatpush.msra.mxu0 %v264
      %304 = vmatpush.msra.mxu0 %v262
      %305 = vmatpush.msra.mxu0 %v260
      %306 = vmatpush.msra.mxu0 %v258
      %307 = vmatpush.msra.mxu0 %v256
      %308 = vmatpush.msra.mxu0 %v254
      %309 = vmatpush.msra.mxu0 %v252
      %310 = vmatpush.msra.mxu0 %v250
      %311 = vmatpush.msra.mxu0 %v248
      %312 = vmatpush.msra.mxu0 %v246
      %313 = vmatmul.f32.gmra.mxu0 %v243
      %v314 = vpop.f32.mrf.mxu0
      %v315 = vadd.f32 0.0, %v314
      %316 = vdwg.mxu0
      %317 = vmatpush.msra.mxu0 %v241
      %318 = vmatpush.msra.mxu0 %v239
      %319 = vmatpush.msra.mxu0 %v237
      %320 = vmatpush.msra.mxu0 %v235
      %321 = vmatpush.msra.mxu0 %v233
      %322 = vmatpush.msra.mxu0 %v231
      %323 = vmatpush.msra.mxu0 %v229
      %324 = vmatpush.msra.mxu0 %v227
      %325 = vmatpush.msra.mxu0 %v225
      %326 = vmatpush.msra.mxu0 %v223
      %327 = vmatpush.msra.mxu0 %v221
      %328 = vmatpush.msra.mxu0 %v219
      %329 = vmatpush.msra.mxu0 %v217
      %330 = vmatpush.msra.mxu0 %v215
      %331 = vmatpush.msra.mxu0 %v213
      %332 = vmatpush.msra.mxu0 %v211
      %333 = vmatmul.f32.gmra.mxu0 %v210
      %v334 = vpop.f32.mrf.mxu0
      %v335 = vadd.f32 %v295, %v334
      %336 = vdwg.mxu0
      %337 = vmatpush.msra.mxu0 %v242
      %338 = vmatpush.msra.mxu0 %v240
      %339 = vmatpush.msra.mxu0 %v238
      %340 = vmatpush.msra.mxu0 %v236
      %341 = vmatpush.msra.mxu0 %v234
      %342 = vmatpush.msra.mxu0 %v232
      %343 = vmatpush.msra.mxu0 %v230
      %344 = vmatpush.msra.mxu0 %v228
      %345 = vmatpush.msra.mxu0 %v226
      %346 = vmatpush.msra.mxu0 %v224
      %347 = vmatpush.msra.mxu0 %v222
      %348 = vmatpush.msra.mxu0 %v220
      %349 = vmatpush.msra.mxu0 %v218
      %350 = vmatpush.msra.mxu0 %v216
      %351 = vmatpush.msra.mxu0 %v214
      %352 = vmatpush.msra.mxu0 %v212
      %353 = vmatmul.f32.gmra.mxu0 %v210
      %v354 = vpop.f32.mrf.mxu0
      %v355 = vadd.f32 %v315, %v354
      %356 = vdwg.mxu0
      %v357 = vld [vmem:[%s201 + $0x1] sm:$0x1f]
      %s358 = scalar_lea.vmem %s2, 512
      %v359 = vld [vmem:[%s358] sm:$0xff]
      %v360 = vld [vmem:[%s358 + $0x8] sm:$0xff]
      %v361 = vld [vmem:[%s358 + $0x10] sm:$0xff]
      %v362 = vld [vmem:[%s358 + $0x18] sm:$0xff]
      %v363 = vld [vmem:[%s358 + $0x20] sm:$0xff]
      %v364 = vld [vmem:[%s358 + $0x28] sm:$0xff]
      %v365 = vld [vmem:[%s358 + $0x30] sm:$0xff]
      %v366 = vld [vmem:[%s358 + $0x38] sm:$0xff]
      %v367 = vld [vmem:[%s358 + $0x40] sm:$0xff]
      %v368 = vld [vmem:[%s358 + $0x48] sm:$0xff]
      %v369 = vld [vmem:[%s358 + $0x50] sm:$0xff]
      %v370 = vld [vmem:[%s358 + $0x58] sm:$0xff]
      %v371 = vld [vmem:[%s358 + $0x60] sm:$0xff]
      %v372 = vld [vmem:[%s358 + $0x68] sm:$0xff]
      %v373 = vld [vmem:[%s358 + $0x70] sm:$0xff]
      %v374 = vld [vmem:[%s358 + $0x78] sm:$0xff]
      %v375 = vld [vmem:[%s358 + $0x80] sm:$0xff]
      %v376 = vld [vmem:[%s358 + $0x88] sm:$0xff]
      %v377 = vld [vmem:[%s358 + $0x90] sm:$0xff]
      %v378 = vld [vmem:[%s358 + $0x98] sm:$0xff]
      %v379 = vld [vmem:[%s358 + $0xa0] sm:$0xff]
      %v380 = vld [vmem:[%s358 + $0xa8] sm:$0xff]
      %v381 = vld [vmem:[%s358 + $0xb0] sm:$0xff]
      %v382 = vld [vmem:[%s358 + $0xb8] sm:$0xff]
      %v383 = vld [vmem:[%s358 + $0xc0] sm:$0xff]
      %v384 = vld [vmem:[%s358 + $0xc8] sm:$0xff]
      %v385 = vld [vmem:[%s358 + $0xd0] sm:$0xff]
      %v386 = vld [vmem:[%s358 + $0xd8] sm:$0xff]
      %v387 = vld [vmem:[%s358 + $0xe0] sm:$0xff]
      %v388 = vld [vmem:[%s358 + $0xe8] sm:$0xff]
      %v389 = vld [vmem:[%s358 + $0xf0] sm:$0xff]
      %v390 = vld [vmem:[%s358 + $0xf8] sm:$0xff]
      %391 = vmatpush.msra.mxu0 %v389
      %392 = vmatpush.msra.mxu0 %v387
      %393 = vmatpush.msra.mxu0 %v385
      %394 = vmatpush.msra.mxu0 %v383
      %395 = vmatpush.msra.mxu0 %v381
      %396 = vmatpush.msra.mxu0 %v379
      %397 = vmatpush.msra.mxu0 %v377
      %398 = vmatpush.msra.mxu0 %v375
      %399 = vmatpush.msra.mxu0 %v373
      %400 = vmatpush.msra.mxu0 %v371
      %401 = vmatpush.msra.mxu0 %v369
      %402 = vmatpush.msra.mxu0 %v367
      %403 = vmatpush.msra.mxu0 %v365
      %404 = vmatpush.msra.mxu0 %v363
      %405 = vmatpush.msra.mxu0 %v361
      %406 = vmatpush.msra.mxu0 %v359
      %407 = vmatmul.f32.gmra.mxu0 %v357
      %v408 = vpop.f32.mrf.mxu0
      %v409 = vadd.f32 0.0, %v408
      %410 = vdwg.mxu0
      %411 = vmatpush.msra.mxu0 %v390
      %412 = vmatpush.msra.mxu0 %v388
      %413 = vmatpush.msra.mxu0 %v386
      %414 = vmatpush.msra.mxu0 %v384
      %415 = vmatpush.msra.mxu0 %v382
      %416 = vmatpush.msra.mxu0 %v380
      %417 = vmatpush.msra.mxu0 %v378
      %418 = vmatpush.msra.mxu0 %v376
      %419 = vmatpush.msra.mxu0 %v374
      %420 = vmatpush.msra.mxu0 %v372
      %421 = vmatpush.msra.mxu0 %v370
      %422 = vmatpush.msra.mxu0 %v368
      %423 = vmatpush.msra.mxu0 %v366
      %424 = vmatpush.msra.mxu0 %v364
      %425 = vmatpush.msra.mxu0 %v362
      %426 = vmatpush.msra.mxu0 %v360
      %427 = vmatmul.f32.gmra.mxu0 %v357
      %v428 = vpop.f32.mrf.mxu0
      %v429 = vadd.f32 0.0, %v428
      %430 = vdwg.mxu0
      %v431 = vadd.f32 %v335, %v409
      %v432 = vadd.f32 %v355, %v429
      %v433 = vld [vmem:[%s205 + $0x1] sm:$0x1f]
      %s434 = scalar_lea.vmem %s2, 768
      %v435 = vld [vmem:[%s434] sm:$0xff]
      %v436 = vld [vmem:[%s434 + $0x8] sm:$0xff]
      %v437 = vld [vmem:[%s434 + $0x10] sm:$0xff]
      %v438 = vld [vmem:[%s434 + $0x18] sm:$0xff]
      %v439 = vld [vmem:[%s434 + $0x20] sm:$0xff]
      %v440 = vld [vmem:[%s434 + $0x28] sm:$0xff]
      %v441 = vld [vmem:[%s434 + $0x30] sm:$0xff]
      %v442 = vld [vmem:[%s434 + $0x38] sm:$0xff]
      %v443 = vld [vmem:[%s434 + $0x40] sm:$0xff]
      %v444 = vld [vmem:[%s434 + $0x48] sm:$0xff]
      %v445 = vld [vmem:[%s434 + $0x50] sm:$0xff]
      %v446 = vld [vmem:[%s434 + $0x58] sm:$0xff]
      %v447 = vld [vmem:[%s434 + $0x60] sm:$0xff]
      %v448 = vld [vmem:[%s434 + $0x68] sm:$0xff]
      %v449 = vld [vmem:[%s434 + $0x70] sm:$0xff]
      %v450 = vld [vmem:[%s434 + $0x78] sm:$0xff]
      %v451 = vld [vmem:[%s434 + $0x80] sm:$0xff]
      %v452 = vld [vmem:[%s434 + $0x88] sm:$0xff]
      %v453 = vld [vmem:[%s434 + $0x90] sm:$0xff]
      %v454 = vld [vmem:[%s434 + $0x98] sm:$0xff]
      %v455 = vld [vmem:[%s434 + $0xa0] sm:$0xff]
      %v456 = vld [vmem:[%s434 + $0xa8] sm:$0xff]
      %v457 = vld [vmem:[%s434 + $0xb0] sm:$0xff]
      %v458 = vld [vmem:[%s434 + $0xb8] sm:$0xff]
      %v459 = vld [vmem:[%s434 + $0xc0] sm:$0xff]
      %v460 = vld [vmem:[%s434 + $0xc8] sm:$0xff]
      %v461 = vld [vmem:[%s434 + $0xd0] sm:$0xff]
      %v462 = vld [vmem:[%s434 + $0xd8] sm:$0xff]
      %v463 = vld [vmem:[%s434 + $0xe0] sm:$0xff]
      %v464 = vld [vmem:[%s434 + $0xe8] sm:$0xff]
      %v465 = vld [vmem:[%s434 + $0xf0] sm:$0xff]
      %v466 = vld [vmem:[%s434 + $0xf8] sm:$0xff]
      %467 = vmatpush.msra.mxu0 %v465
      %468 = vmatpush.msra.mxu0 %v463
      %469 = vmatpush.msra.mxu0 %v461
      %470 = vmatpush.msra.mxu0 %v459
      %471 = vmatpush.msra.mxu0 %v457
      %472 = vmatpush.msra.mxu0 %v455
      %473 = vmatpush.msra.mxu0 %v453
      %474 = vmatpush.msra.mxu0 %v451
      %475 = vmatpush.msra.mxu0 %v449
      %476 = vmatpush.msra.mxu0 %v447
      %477 = vmatpush.msra.mxu0 %v445
      %478 = vmatpush.msra.mxu0 %v443
      %479 = vmatpush.msra.mxu0 %v441
      %480 = vmatpush.msra.mxu0 %v439
      %481 = vmatpush.msra.mxu0 %v437
      %482 = vmatpush.msra.mxu0 %v435
      %483 = vmatmul.f32.gmra.mxu0 %v433
      %v484 = vpop.f32.mrf.mxu0
      %v485 = vadd.f32 0.0, %v484
      %486 = vdwg.mxu0
      %487 = vmatpush.msra.mxu0 %v466
      %488 = vmatpush.msra.mxu0 %v464
      %489 = vmatpush.msra.mxu0 %v462
      %490 = vmatpush.msra.mxu0 %v460
      %491 = vmatpush.msra.mxu0 %v458
      %492 = vmatpush.msra.mxu0 %v456
      %493 = vmatpush.msra.mxu0 %v454
      %494 = vmatpush.msra.mxu0 %v452
      %495 = vmatpush.msra.mxu0 %v450
      %496 = vmatpush.msra.mxu0 %v448
      %497 = vmatpush.msra.mxu0 %v446
      %498 = vmatpush.msra.mxu0 %v444
      %499 = vmatpush.msra.mxu0 %v442
      %500 = vmatpush.msra.mxu0 %v440
      %501 = vmatpush.msra.mxu0 %v438
      %502 = vmatpush.msra.mxu0 %v436
      %503 = vmatmul.f32.gmra.mxu0 %v433
      %v504 = vpop.f32.mrf.mxu0
      %v505 = vadd.f32 0.0, %v504
      %506 = vdwg.mxu0
      %v507 = vadd.f32 %v431, %v485
      %v508 = vadd.f32 %v432, %v505
      %v509 = vld [vmem:[%s201 + $0x2] sm:$0x1f]
      %s510 = scalar_lea.vmem %s2, 1024
      %v511 = vld [vmem:[%s510] sm:$0xff]
      %v512 = vld [vmem:[%s510 + $0x8] sm:$0xff]
      %v513 = vld [vmem:[%s510 + $0x10] sm:$0xff]
      %v514 = vld [vmem:[%s510 + $0x18] sm:$0xff]
      %v515 = vld [vmem:[%s510 + $0x20] sm:$0xff]
      %v516 = vld [vmem:[%s510 + $0x28] sm:$0xff]
      %v517 = vld [vmem:[%s510 + $0x30] sm:$0xff]
      %v518 = vld [vmem:[%s510 + $0x38] sm:$0xff]
      %v519 = vld [vmem:[%s510 + $0x40] sm:$0xff]
      %v520 = vld [vmem:[%s510 + $0x48] sm:$0xff]
      %v521 = vld [vmem:[%s510 + $0x50] sm:$0xff]
      %v522 = vld [vmem:[%s510 + $0x58] sm:$0xff]
      %v523 = vld [vmem:[%s510 + $0x60] sm:$0xff]
      %v524 = vld [vmem:[%s510 + $0x68] sm:$0xff]
      %v525 = vld [vmem:[%s510 + $0x70] sm:$0xff]
      %v526 = vld [vmem:[%s510 + $0x78] sm:$0xff]
      %v527 = vld [vmem:[%s510 + $0x80] sm:$0xff]
      %v528 = vld [vmem:[%s510 + $0x88] sm:$0xff]
      %v529 = vld [vmem:[%s510 + $0x90] sm:$0xff]
      %v530 = vld [vmem:[%s510 + $0x98] sm:$0xff]
      %v531 = vld [vmem:[%s510 + $0xa0] sm:$0xff]
      %v532 = vld [vmem:[%s510 + $0xa8] sm:$0xff]
      %v533 = vld [vmem:[%s510 + $0xb0] sm:$0xff]
      %v534 = vld [vmem:[%s510 + $0xb8] sm:$0xff]
      %v535 = vld [vmem:[%s510 + $0xc0] sm:$0xff]
      %v536 = vld [vmem:[%s510 + $0xc8] sm:$0xff]
      %v537 = vld [vmem:[%s510 + $0xd0] sm:$0xff]
      %v538 = vld [vmem:[%s510 + $0xd8] sm:$0xff]
      %v539 = vld [vmem:[%s510 + $0xe0] sm:$0xff]
      %v540 = vld [vmem:[%s510 + $0xe8] sm:$0xff]
      %v541 = vld [vmem:[%s510 + $0xf0] sm:$0xff]
      %v542 = vld [vmem:[%s510 + $0xf8] sm:$0xff]
      %543 = vmatpush.msra.mxu0 %v541
      %544 = vmatpush.msra.mxu0 %v539
      %545 = vmatpush.msra.mxu0 %v537
      %546 = vmatpush.msra.mxu0 %v535
      %547 = vmatpush.msra.mxu0 %v533
      %548 = vmatpush.msra.mxu0 %v531
      %549 = vmatpush.msra.mxu0 %v529
      %550 = vmatpush.msra.mxu0 %v527
      %551 = vmatpush.msra.mxu0 %v525
      %552 = vmatpush.msra.mxu0 %v523
      %553 = vmatpush.msra.mxu0 %v521
      %554 = vmatpush.msra.mxu0 %v519
      %555 = vmatpush.msra.mxu0 %v517
      %556 = vmatpush.msra.mxu0 %v515
      %557 = vmatpush.msra.mxu0 %v513
      %558 = vmatpush.msra.mxu0 %v511
      %559 = vmatmul.f32.gmra.mxu0 %v509
      %v560 = vpop.f32.mrf.mxu0
      %v561 = vadd.f32 0.0, %v560
      %562 = vdwg.mxu0
      %563 = vmatpush.msra.mxu0 %v542
      %564 = vmatpush.msra.mxu0 %v540
      %565 = vmatpush.msra.mxu0 %v538
      %566 = vmatpush.msra.mxu0 %v536
      %567 = vmatpush.msra.mxu0 %v534
      %568 = vmatpush.msra.mxu0 %v532
      %569 = vmatpush.msra.mxu0 %v530
      %570 = vmatpush.msra.mxu0 %v528
      %571 = vmatpush.msra.mxu0 %v526
      %572 = vmatpush.msra.mxu0 %v524
      %573 = vmatpush.msra.mxu0 %v522
      %574 = vmatpush.msra.mxu0 %v520
      %575 = vmatpush.msra.mxu0 %v518
      %576 = vmatpush.msra.mxu0 %v516
      %577 = vmatpush.msra.mxu0 %v514
      %578 = vmatpush.msra.mxu0 %v512
      %579 = vmatmul.f32.gmra.mxu0 %v509
      %v580 = vpop.f32.mrf.mxu0
      %v581 = vadd.f32 0.0, %v580
      %582 = vdwg.mxu0
      %v583 = vadd.f32 %v507, %v561
      %v584 = vadd.f32 %v508, %v581
      %v585 = vmax.f32 %v583, %v584
      %586 = vmatpush.msra.mxu0 %v275
      %587 = vmatpush.msra.mxu0 %v273
      %588 = vmatpush.msra.mxu0 %v271
      %589 = vmatpush.msra.mxu0 %v269
      %590 = vmatpush.msra.mxu0 %v267
      %591 = vmatpush.msra.mxu0 %v265
      %592 = vmatpush.msra.mxu0 %v263
      %593 = vmatpush.msra.mxu0 %v261
      %594 = vmatpush.msra.mxu0 %v259
      %595 = vmatpush.msra.mxu0 %v257
      %596 = vmatpush.msra.mxu0 %v255
      %597 = vmatpush.msra.mxu0 %v253
      %598 = vmatpush.msra.mxu0 %v251
      %599 = vmatpush.msra.mxu0 %v249
      %600 = vmatpush.msra.mxu0 %v247
      %601 = vmatpush.msra.mxu0 %v245
      %602 = vmatmul.f32.gmra.mxu0 %v357
      %v603 = vpop.f32.mrf.mxu0
      %v604 = vadd.f32 0.0, %v603
      %605 = vdwg.mxu0
      %606 = vmatpush.msra.mxu0 %v276
      %607 = vmatpush.msra.mxu0 %v274
      %608 = vmatpush.msra.mxu0 %v272
      %609 = vmatpush.msra.mxu0 %v270
      %610 = vmatpush.msra.mxu0 %v268
      %611 = vmatpush.msra.mxu0 %v266
      %612 = vmatpush.msra.mxu0 %v264
      %613 = vmatpush.msra.mxu0 %v262
      %614 = vmatpush.msra.mxu0 %v260
      %615 = vmatpush.msra.mxu0 %v258
      %616 = vmatpush.msra.mxu0 %v256
      %617 = vmatpush.msra.mxu0 %v254
      %618 = vmatpush.msra.mxu0 %v252
      %619 = vmatpush.msra.mxu0 %v250
      %620 = vmatpush.msra.mxu0 %v248
      %621 = vmatpush.msra.mxu0 %v246
      %622 = vmatmul.f32.gmra.mxu0 %v357
      %v623 = vpop.f32.mrf.mxu0
      %v624 = vadd.f32 0.0, %v623
      %625 = vdwg.mxu0
      %626 = vmatpush.msra.mxu0 %v241
      %627 = vmatpush.msra.mxu0 %v239
      %628 = vmatpush.msra.mxu0 %v237
      %629 = vmatpush.msra.mxu0 %v235
      %630 = vmatpush.msra.mxu0 %v233
      %631 = vmatpush.msra.mxu0 %v231
      %632 = vmatpush.msra.mxu0 %v229
      %633 = vmatpush.msra.mxu0 %v227
      %634 = vmatpush.msra.mxu0 %v225
      %635 = vmatpush.msra.mxu0 %v223
      %636 = vmatpush.msra.mxu0 %v221
      %637 = vmatpush.msra.mxu0 %v219
      %638 = vmatpush.msra.mxu0 %v217
      %639 = vmatpush.msra.mxu0 %v215
      %640 = vmatpush.msra.mxu0 %v213
      %641 = vmatpush.msra.mxu0 %v211
      %642 = vmatmul.f32.gmra.mxu0 %v243
      %v643 = vpop.f32.mrf.mxu0
      %v644 = vadd.f32 %v604, %v643
      %645 = vdwg.mxu0
      %646 = vmatpush.msra.mxu0 %v242
      %647 = vmatpush.msra.mxu0 %v240
      %648 = vmatpush.msra.mxu0 %v238
      %649 = vmatpush.msra.mxu0 %v236
      %650 = vmatpush.msra.mxu0 %v234
      %651 = vmatpush.msra.mxu0 %v232
      %652 = vmatpush.msra.mxu0 %v230
      %653 = vmatpush.msra.mxu0 %v228
      %654 = vmatpush.msra.mxu0 %v226
      %655 = vmatpush.msra.mxu0 %v224
      %656 = vmatpush.msra.mxu0 %v222
      %657 = vmatpush.msra.mxu0 %v220
      %658 = vmatpush.msra.mxu0 %v218
      %659 = vmatpush.msra.mxu0 %v216
      %660 = vmatpush.msra.mxu0 %v214
      %661 = vmatpush.msra.mxu0 %v212
      %662 = vmatmul.f32.gmra.mxu0 %v243
      %v663 = vpop.f32.mrf.mxu0
      %v664 = vadd.f32 %v624, %v663
      %665 = vdwg.mxu0
      %666 = vmatpush.msra.mxu0 %v389
      %667 = vmatpush.msra.mxu0 %v387
      %668 = vmatpush.msra.mxu0 %v385
      %669 = vmatpush.msra.mxu0 %v383
      %670 = vmatpush.msra.mxu0 %v381
      %671 = vmatpush.msra.mxu0 %v379
      %672 = vmatpush.msra.mxu0 %v377
      %673 = vmatpush.msra.mxu0 %v375
      %674 = vmatpush.msra.mxu0 %v373
      %675 = vmatpush.msra.mxu0 %v371
      %676 = vmatpush.msra.mxu0 %v369
      %677 = vmatpush.msra.mxu0 %v367
      %678 = vmatpush.msra.mxu0 %v365
      %679 = vmatpush.msra.mxu0 %v363
      %680 = vmatpush.msra.mxu0 %v361
      %681 = vmatpush.msra.mxu0 %v359
      %682 = vmatmul.f32.gmra.mxu0 %v433
      %v683 = vpop.f32.mrf.mxu0
      %v684 = vadd.f32 0.0, %v683
      %685 = vdwg.mxu0
      %686 = vmatpush.msra.mxu0 %v390
      %687 = vmatpush.msra.mxu0 %v388
      %688 = vmatpush.msra.mxu0 %v386
      %689 = vmatpush.msra.mxu0 %v384
      %690 = vmatpush.msra.mxu0 %v382
      %691 = vmatpush.msra.mxu0 %v380
      %692 = vmatpush.msra.mxu0 %v378
      %693 = vmatpush.msra.mxu0 %v376
      %694 = vmatpush.msra.mxu0 %v374
      %695 = vmatpush.msra.mxu0 %v372
      %696 = vmatpush.msra.mxu0 %v370
      %697 = vmatpush.msra.mxu0 %v368
      %698 = vmatpush.msra.mxu0 %v366
      %699 = vmatpush.msra.mxu0 %v364
      %700 = vmatpush.msra.mxu0 %v362
      %701 = vmatpush.msra.mxu0 %v360
      %702 = vmatmul.f32.gmra.mxu0 %v433
      %v703 = vpop.f32.mrf.mxu0
      %v704 = vadd.f32 0.0, %v703
      %705 = vdwg.mxu0
      %v706 = vadd.f32 %v644, %v684
      %v707 = vadd.f32 %v664, %v704
      %708 = vmatpush.msra.mxu0 %v465
      %709 = vmatpush.msra.mxu0 %v463
      %710 = vmatpush.msra.mxu0 %v461
      %711 = vmatpush.msra.mxu0 %v459
      %712 = vmatpush.msra.mxu0 %v457
      %713 = vmatpush.msra.mxu0 %v455
      %714 = vmatpush.msra.mxu0 %v453
      %715 = vmatpush.msra.mxu0 %v451
      %716 = vmatpush.msra.mxu0 %v449
      %717 = vmatpush.msra.mxu0 %v447
      %718 = vmatpush.msra.mxu0 %v445
      %719 = vmatpush.msra.mxu0 %v443
      %720 = vmatpush.msra.mxu0 %v441
      %721 = vmatpush.msra.mxu0 %v439
      %722 = vmatpush.msra.mxu0 %v437
      %723 = vmatpush.msra.mxu0 %v435
      %724 = vmatmul.f32.gmra.mxu0 %v509
      %v725 = vpop.f32.mrf.mxu0
      %v726 = vadd.f32 0.0, %v725
      %727 = vdwg.mxu0
      %728 = vmatpush.msra.mxu0 %v466
      %729 = vmatpush.msra.mxu0 %v464
      %730 = vmatpush.msra.mxu0 %v462
      %731 = vmatpush.msra.mxu0 %v460
      %732 = vmatpush.msra.mxu0 %v458
      %733 = vmatpush.msra.mxu0 %v456
      %734 = vmatpush.msra.mxu0 %v454
      %735 = vmatpush.msra.mxu0 %v452
      %736 = vmatpush.msra.mxu0 %v450
      %737 = vmatpush.msra.mxu0 %v448
      %738 = vmatpush.msra.mxu0 %v446
      %739 = vmatpush.msra.mxu0 %v444
      %740 = vmatpush.msra.mxu0 %v442
      %741 = vmatpush.msra.mxu0 %v440
      %742 = vmatpush.msra.mxu0 %v438
      %743 = vmatpush.msra.mxu0 %v436
      %744 = vmatmul.f32.gmra.mxu0 %v509
      %v745 = vpop.f32.mrf.mxu0
      %v746 = vadd.f32 0.0, %v745
      %747 = vdwg.mxu0
      %v748 = vadd.f32 %v706, %v726
      %v749 = vadd.f32 %v707, %v746
      %v750 = vld [vmem:[%s205 + $0x2] sm:$0x1f]
      %751 = vmatpush.msra.mxu0 %v541
      %752 = vmatpush.msra.mxu0 %v539
      %753 = vmatpush.msra.mxu0 %v537
      %754 = vmatpush.msra.mxu0 %v535
      %755 = vmatpush.msra.mxu0 %v533
      %756 = vmatpush.msra.mxu0 %v531
      %757 = vmatpush.msra.mxu0 %v529
      %758 = vmatpush.msra.mxu0 %v527
      %759 = vmatpush.msra.mxu0 %v525
      %760 = vmatpush.msra.mxu0 %v523
      %761 = vmatpush.msra.mxu0 %v521
      %762 = vmatpush.msra.mxu0 %v519
      %763 = vmatpush.msra.mxu0 %v517
      %764 = vmatpush.msra.mxu0 %v515
      %765 = vmatpush.msra.mxu0 %v513
      %766 = vmatpush.msra.mxu0 %v511
      %767 = vmatmul.f32.gmra.mxu0 %v750
      %v768 = vpop.f32.mrf.mxu0
      %v769 = vadd.f32 0.0, %v768
      %770 = vdwg.mxu0
      %771 = vmatpush.msra.mxu0 %v542
      %772 = vmatpush.msra.mxu0 %v540
      %773 = vmatpush.msra.mxu0 %v538
      %774 = vmatpush.msra.mxu0 %v536
      %775 = vmatpush.msra.mxu0 %v534
      %776 = vmatpush.msra.mxu0 %v532
      %777 = vmatpush.msra.mxu0 %v530
      %778 = vmatpush.msra.mxu0 %v528
      %779 = vmatpush.msra.mxu0 %v526
      %780 = vmatpush.msra.mxu0 %v524
      %781 = vmatpush.msra.mxu0 %v522
      %782 = vmatpush.msra.mxu0 %v520
      %783 = vmatpush.msra.mxu0 %v518
      %784 = vmatpush.msra.mxu0 %v516
      %785 = vmatpush.msra.mxu0 %v514
      %786 = vmatpush.msra.mxu0 %v512
      %787 = vmatmul.f32.gmra.mxu0 %v750
      %v788 = vpop.f32.mrf.mxu0
      %v789 = vadd.f32 0.0, %v788
      %790 = vdwg.mxu0
      %v791 = vadd.f32 %v748, %v769
      %v792 = vadd.f32 %v749, %v789
      %v793 = vmax.f32 %v791, %v792
      %v794 = vmax.f32 %v585, %v793
      %v795 = vld [vmem:[%s3] sm:$0x1]
      %v797 = vperm.slane %v795, 0
      %v799 = vadd.f32 %v794, %v797
      %v800 = vmax.f32 %v799, 0.0
      %801 = vst [vmem:[%s209] sm:$0x1f] %v800
      %p802 = scmp.lt.s32.totalorder %s15, 1
      %s803 = scalar_select %p802, %s15, 1
      %s804 = smul.addr %s803, 8
      %s805 = scalar_lea.vmem %s4, %s804
      // Predicated region
      $region37: #{classic_model_forward.4} parent=35 // pred_check
        %p806 = pneg %p127
      $region38: #{classic_model_forward.4} parent=35 // pred_check_branch
        %808 = sbr.rel (%p806) target = $region40
      $region39: #{classic_model_forward.4} parent=35 // pred_region
        _
      $region40: #{classic_model_forward.4} parent=35 // pred_fallthru
        _
    $region36: #{classic_model_forward.4} parent=5 // pred_fallthru
      _
    %p809 = scmp.le.s32.totalorder 2, %s10
    // Predicated region
    $region41: #{classic_model_forward.4} parent=5 // pred_check
      %p810 = pneg %p809
    $region42: #{classic_model_forward.4} parent=5 // pred_check_branch
      %812 = sbr.rel (%p810) target = $region44
    $region43: #{classic_model_forward.4} parent=5 // pred_region
      %s813 = ssub.s32 %s10, 2
      // Predicated region
      $region45: #{classic_model_forward.4} parent=43 // pred_check
        %p814 = pneg %p133
      $region46: #{classic_model_forward.4} parent=43 // pred_check_branch
        %816 = sbr.rel (%p814) target = $region48
      $region47: #{classic_model_forward.4} parent=43 // pred_region
        %p817 = scmp.lt.s32.totalorder %s16, 1
        %s818 = scalar_select %p817, %s16, 1
        %s819 = smul.addr %s818, 8
        %s820 = scalar_lea.vmem %s4, %s819
      $region48: #{classic_model_forward.4} parent=43 // pred_fallthru
        _
    $region44: #{classic_model_forward.4} parent=5 // pred_fallthru
      _
  $region6: #{classic_model_forward.4} parent=0 // loop_footer
    %s14 = sadd.s32 1, %s10
  $region7: #{classic_model_forward.4} parent=0 // loop_footer_branch
    %9 = sbr.rel target = $region3
  $region8: #{classic_model_forward.4} parent=0 // loop_exit
    _

// kernel: classic_model_forward.5
$region0: #{classic_model_forward.5}
  #allocation0 [shape = 'u32[]', space=smem, size = 0x4, offset = 0x4, fixed_abs, tag = 'smem constant byte address 0x4 - core index']
  #allocation1 [shape = 'u32[72,128]{1,0:T(1,128)}', space=vmem, size = 0x9000, scoped, tag = 'internal scratch']
  %s0 = inlined_call_operand.vmem [shape: f32[8,640], index: 0, kind: input, shape index: {}]
  %s1 = inlined_call_operand.vmem [shape: f32[640,128], index: 1, kind: input, shape index: {}]
  %s2 = inlined_call_operand.vmem [shape: f32[1,128], index: 2, kind: input, shape index: {}]
  %s3 = inlined_call_operand.vmem [shape: f32[128,128], index: 3, kind: input, shape index: {}]
  %s4 = inlined_call_operand.vmem [shape: f32[1,128], index: 4, kind: input, shape index: {}]
  %s5 = inlined_call_operand.vmem [shape: f32[128,128], index: 5, kind: input, shape index: {}]
  %s6 = inlined_call_operand.vmem [shape: f32[1,128], index: 6, kind: input, shape index: {}]
  %s7 = inlined_call_operand.vmem [shape: f32[8,128], index: 7, kind: output, shape index: {}]
  %s8 = sld [smem:[#allocation0]]
  $region38: #{classic_model_forward.5} parent=0
    _
  %s10 = ssub.s32 1, %s8
  %s11 = scalar_select 0, %s10, %s8
  // Predicated region
  $region2: #{classic_model_forward.5} parent=0 // pred_check
    _
  $region3: #{classic_model_forward.5} parent=0 // pred_check_branch
    %13 = sbr.rel (0) target = $region5
  $region4: #{classic_model_forward.5} parent=0 // pred_region
    _
  $region5: #{classic_model_forward.5} parent=0 // pred_fallthru
    _
  // Predicated region
  $region6: #{classic_model_forward.5} parent=0 // pred_check
    _
  $region7: #{classic_model_forward.5} parent=0 // pred_check_branch
    %15 = sbr.rel (0) target = $region9
  $region8: #{classic_model_forward.5} parent=0 // pred_region
    _
  $region9: #{classic_model_forward.5} parent=0 // pred_fallthru
    _
  // Predicated region
  $region10: #{classic_model_forward.5} parent=0 // pred_check
    _
  $region11: #{classic_model_forward.5} parent=0 // pred_check_branch
    %17 = sbr.rel (0) target = $region13
  $region12: #{classic_model_forward.5} parent=0 // pred_region
    _
  $region13: #{classic_model_forward.5} parent=0 // pred_fallthru
    _
  // Predicated region
  $region14: #{classic_model_forward.5} parent=0 // pred_check
    _
  $region15: #{classic_model_forward.5} parent=0 // pred_check_branch
    %19 = sbr.rel (0) target = $region17
  $region16: #{classic_model_forward.5} parent=0 // pred_region
    _
  $region17: #{classic_model_forward.5} parent=0 // pred_fallthru
    _
  // Predicated region
  $region18: #{classic_model_forward.5} parent=0 // pred_check
    _
  $region19: #{classic_model_forward.5} parent=0 // pred_check_branch
    %21 = sbr.rel (0) target = $region21
  $region20: #{classic_model_forward.5} parent=0 // pred_region
    _
  $region21: #{classic_model_forward.5} parent=0 // pred_fallthru
    _
  // Predicated region
  $region22: #{classic_model_forward.5} parent=0 // pred_check
    _
  $region23: #{classic_model_forward.5} parent=0 // pred_check_branch
    %23 = sbr.rel (0) target = $region25
  $region24: #{classic_model_forward.5} parent=0 // pred_region
    _
  $region25: #{classic_model_forward.5} parent=0 // pred_fallthru
    _
  // Predicated region
  $region26: #{classic_model_forward.5} parent=0 // pred_check
    _
  $region27: #{classic_model_forward.5} parent=0 // pred_check_branch
    %25 = sbr.rel (0) target = $region29
  $region28: #{classic_model_forward.5} parent=0 // pred_region
    _
  $region29: #{classic_model_forward.5} parent=0 // pred_fallthru
    _
  %v26 = vld [vmem:[%s0] sm:$0xff]
  %v27 = vld [vmem:[%s0 + $0x8] sm:$0xff]
  %v28 = vld [vmem:[%s0 + $0x10] sm:$0xff]
  %v29 = vld [vmem:[%s0 + $0x18] sm:$0xff]
  %v30 = vld [vmem:[%s0 + $0x20] sm:$0xff]
  %v31 = vld [vmem:[%s1] sm:$0xff]
  %v32 = vld [vmem:[%s1 + $0x8] sm:$0xff]
  %v33 = vld [vmem:[%s1 + $0x10] sm:$0xff]
  %v34 = vld [vmem:[%s1 + $0x18] sm:$0xff]
  %v35 = vld [vmem:[%s1 + $0x20] sm:$0xff]
  %v36 = vld [vmem:[%s1 + $0x28] sm:$0xff]
  %v37 = vld [vmem:[%s1 + $0x30] sm:$0xff]
  %v38 = vld [vmem:[%s1 + $0x38] sm:$0xff]
  %v39 = vld [vmem:[%s1 + $0x40] sm:$0xff]
  %v40 = vld [vmem:[%s1 + $0x48] sm:$0xff]
  %v41 = vld [vmem:[%s1 + $0x50] sm:$0xff]
  %v42 = vld [vmem:[%s1 + $0x58] sm:$0xff]
  %v43 = vld [vmem:[%s1 + $0x60] sm:$0xff]
  %v44 = vld [vmem:[%s1 + $0x68] sm:$0xff]
  %v45 = vld [vmem:[%s1 + $0x70] sm:$0xff]
  %v46 = vld [vmem:[%s1 + $0x78] sm:$0xff]
  %v47 = vld [vmem:[%s1 + $0x80] sm:$0xff]
  %v48 = vld [vmem:[%s1 + $0x88] sm:$0xff]
  %v49 = vld [vmem:[%s1 + $0x90] sm:$0xff]
  %v50 = vld [vmem:[%s1 + $0x98] sm:$0xff]
  %v51 = vld [vmem:[%s1 + $0xa0] sm:$0xff]
  %v52 = vld [vmem:[%s1 + $0xa8] sm:$0xff]
  %v53 = vld [vmem:[%s1 + $0xb0] sm:$0xff]
  %v54 = vld [vmem:[%s1 + $0xb8] sm:$0xff]
  %v55 = vld [vmem:[%s1 + $0xc0] sm:$0xff]
  %v56 = vld [vmem:[%s1 + $0xc8] sm:$0xff]
  %v57 = vld [vmem:[%s1 + $0xd0] sm:$0xff]
  %v58 = vld [vmem:[%s1 + $0xd8] sm:$0xff]
  %v59 = vld [vmem:[%s1 + $0xe0] sm:$0xff]
  %v60 = vld [vmem:[%s1 + $0xe8] sm:$0xff]
  %v61 = vld [vmem:[%s1 + $0xf0] sm:$0xff]
  %v62 = vld [vmem:[%s1 + $0xf8] sm:$0xff]
  %v63 = vld [vmem:[%s1 + $0x100] sm:$0xff]
  %v64 = vld [vmem:[%s1 + $0x108] sm:$0xff]
  %v65 = vld [vmem:[%s1 + $0x110] sm:$0xff]
  %v66 = vld [vmem:[%s1 + $0x118] sm:$0xff]
  %v67 = vld [vmem:[%s1 + $0x120] sm:$0xff]
  %v68 = vld [vmem:[%s1 + $0x128] sm:$0xff]
  %v69 = vld [vmem:[%s1 + $0x130] sm:$0xff]
  %v70 = vld [vmem:[%s1 + $0x138] sm:$0xff]
  %v71 = vld [vmem:[%s1 + $0x140] sm:$0xff]
  %v72 = vld [vmem:[%s1 + $0x148] sm:$0xff]
  %v73 = vld [vmem:[%s1 + $0x150] sm:$0xff]
  %v74 = vld [vmem:[%s1 + $0x158] sm:$0xff]
  %v75 = vld [vmem:[%s1 + $0x160] sm:$0xff]
  %v76 = vld [vmem:[%s1 + $0x168] sm:$0xff]
  %v77 = vld [vmem:[%s1 + $0x170] sm:$0xff]
  %v78 = vld [vmem:[%s1 + $0x178] sm:$0xff]
  %v79 = vld [vmem:[%s1 + $0x180] sm:$0xff]
  %v80 = vld [vmem:[%s1 + $0x188] sm:$0xff]
  %v81 = vld [vmem:[%s1 + $0x190] sm:$0xff]
  %v82 = vld [vmem:[%s1 + $0x198] sm:$0xff]
  %v83 = vld [vmem:[%s1 + $0x1a0] sm:$0xff]
  %v84 = vld [vmem:[%s1 + $0x1a8] sm:$0xff]
  %v85 = vld [vmem:[%s1 + $0x1b0] sm:$0xff]
  %v86 = vld [vmem:[%s1 + $0x1b8] sm:$0xff]
  %v87 = vld [vmem:[%s1 + $0x1c0] sm:$0xff]
  %v88 = vld [vmem:[%s1 + $0x1c8] sm:$0xff]
  %v89 = vld [vmem:[%s1 + $0x1d0] sm:$0xff]
  %v90 = vld [vmem:[%s1 + $0x1d8] sm:$0xff]
  %v91 = vld [vmem:[%s1 + $0x1e0] sm:$0xff]
  %v92 = vld [vmem:[%s1 + $0x1e8] sm:$0xff]
  %v93 = vld [vmem:[%s1 + $0x1f0] sm:$0xff]
  %v94 = vld [vmem:[%s1 + $0x1f8] sm:$0xff]
  %v95 = vld [vmem:[%s1 + $0x200] sm:$0xff]
  %v96 = vld [vmem:[%s1 + $0x208] sm:$0xff]
  %v97 = vld [vmem:[%s1 + $0x210] sm:$0xff]
  %v98 = vld [vmem:[%s1 + $0x218] sm:$0xff]
  %v99 = vld [vmem:[%s1 + $0x220] sm:$0xff]
  %v100 = vld [vmem:[%s1 + $0x228] sm:$0xff]
  %v101 = vld [vmem:[%s1 + $0x230] sm:$0xff]
  %v102 = vld [vmem:[%s1 + $0x238] sm:$0xff]
  %v103 = vld [vmem:[%s1 + $0x240] sm:$0xff]
  %v104 = vld [vmem:[%s1 + $0x248] sm:$0xff]
  %v105 = vld [vmem:[%s1 + $0x250] sm:$0xff]
  %v106 = vld [vmem:[%s1 + $0x258] sm:$0xff]
  %v107 = vld [vmem:[%s1 + $0x260] sm:$0xff]
  %v108 = vld [vmem:[%s1 + $0x268] sm:$0xff]
  %v109 = vld [vmem:[%s1 + $0x270] sm:$0xff]
  %v110 = vld [vmem:[%s1 + $0x278] sm:$0xff]
  %v111 = vld [vmem:[%s2] sm:$0x1]
  %v113 = vperm.slane %v111, 0
  %115 = vmatpush.msra.mxu0 %v46
  %116 = vmatpush.msra.mxu0 %v45
  %117 = vmatpush.msra.mxu0 %v44
  %118 = vmatpush.msra.mxu0 %v43
  %119 = vmatpush.msra.mxu0 %v42
  %120 = vmatpush.msra.mxu0 %v41
  %121 = vmatpush.msra.mxu0 %v40
  %122 = vmatpush.msra.mxu0 %v39
  %123 = vmatpush.msra.mxu0 %v38
  %124 = vmatpush.msra.mxu0 %v37
  %125 = vmatpush.msra.mxu0 %v36
  %126 = vmatpush.msra.mxu0 %v35
  %127 = vmatpush.msra.mxu0 %v34
  %128 = vmatpush.msra.mxu0 %v33
  %129 = vmatpush.msra.mxu0 %v32
  %130 = vmatpush.msra.mxu0 %v31
  %131 = vmatmul.f32.gmra.mxu0 %v26
  %v132 = vpop.f32.mrf.mxu0
  %v133 = vadd.f32 %v113, %v132
  %134 = vdwg.mxu0
  %135 = vmatpush.msra.mxu0 %v62
  %136 = vmatpush.msra.mxu0 %v61
  %137 = vmatpush.msra.mxu0 %v60
  %138 = vmatpush.msra.mxu0 %v59
  %139 = vmatpush.msra.mxu0 %v58
  %140 = vmatpush.msra.mxu0 %v57
  %141 = vmatpush.msra.mxu0 %v56
  %142 = vmatpush.msra.mxu0 %v55
  %143 = vmatpush.msra.mxu0 %v54
  %144 = vmatpush.msra.mxu0 %v53
  %145 = vmatpush.msra.mxu0 %v52
  %146 = vmatpush.msra.mxu0 %v51
  %147 = vmatpush.msra.mxu0 %v50
  %148 = vmatpush.msra.mxu0 %v49
  %149 = vmatpush.msra.mxu0 %v48
  %150 = vmatpush.msra.mxu0 %v47
  %151 = vmatmul.f32.gmra.mxu0 %v27
  %v152 = vpop.f32.mrf.mxu0
  %v153 = vadd.f32 %v133, %v152
  %154 = vdwg.mxu0
  %155 = vmatpush.msra.mxu0 %v78
  %156 = vmatpush.msra.mxu0 %v77
  %157 = vmatpush.msra.mxu0 %v76
  %158 = vmatpush.msra.mxu0 %v75
  %159 = vmatpush.msra.mxu0 %v74
  %160 = vmatpush.msra.mxu0 %v73
  %161 = vmatpush.msra.mxu0 %v72
  %162 = vmatpush.msra.mxu0 %v71
  %163 = vmatpush.msra.mxu0 %v70
  %164 = vmatpush.msra.mxu0 %v69
  %165 = vmatpush.msra.mxu0 %v68
  %166 = vmatpush.msra.mxu0 %v67
  %167 = vmatpush.msra.mxu0 %v66
  %168 = vmatpush.msra.mxu0 %v65
  %169 = vmatpush.msra.mxu0 %v64
  %170 = vmatpush.msra.mxu0 %v63
  %171 = vmatmul.f32.gmra.mxu0 %v28
  %v172 = vpop.f32.mrf.mxu0
  %v173 = vadd.f32 %v153, %v172
  %174 = vdwg.mxu0
  %175 = vmatpush.msra.mxu0 %v94
  %176 = vmatpush.msra.mxu0 %v93
  %177 = vmatpush.msra.mxu0 %v92
  %178 = vmatpush.msra.mxu0 %v91
  %179 = vmatpush.msra.mxu0 %v90
  %180 = vmatpush.msra.mxu0 %v89
  %181 = vmatpush.msra.mxu0 %v88
  %182 = vmatpush.msra.mxu0 %v87
  %183 = vmatpush.msra.mxu0 %v86
  %184 = vmatpush.msra.mxu0 %v85
  %185 = vmatpush.msra.mxu0 %v84
  %186 = vmatpush.msra.mxu0 %v83
  %187 = vmatpush.msra.mxu0 %v82
  %188 = vmatpush.msra.mxu0 %v81
  %189 = vmatpush.msra.mxu0 %v80
  %190 = vmatpush.msra.mxu0 %v79
  %191 = vmatmul.f32.gmra.mxu0 %v29
  %v192 = vpop.f32.mrf.mxu0
  %v193 = vadd.f32 %v173, %v192
  %194 = vdwg.mxu0
  %195 = vmatpush.msra.mxu0 %v110
  %196 = vmatpush.msra.mxu0 %v109
  %197 = vmatpush.msra.mxu0 %v108
  %198 = vmatpush.msra.mxu0 %v107
  %199 = vmatpush.msra.mxu0 %v106
  %200 = vmatpush.msra.mxu0 %v105
  %201 = vmatpush.msra.mxu0 %v104
  %202 = vmatpush.msra.mxu0 %v103
  %203 = vmatpush.msra.mxu0 %v102
  %204 = vmatpush.msra.mxu0 %v101
  %205 = vmatpush.msra.mxu0 %v100
  %206 = vmatpush.msra.mxu0 %v99
  %207 = vmatpush.msra.mxu0 %v98
  %208 = vmatpush.msra.mxu0 %v97
  %209 = vmatpush.msra.mxu0 %v96
  %210 = vmatpush.msra.mxu0 %v95
  %211 = vmatmul.f32.gmra.mxu0 %v30
  %v212 = vpop.f32.mrf.mxu0
  %v213 = vadd.f32 %v193, %v212
  %214 = vdwg.mxu0
  %v215 = vmax.f32 %v213, 0.0
  %v216 = vld [vmem:[%s3] sm:$0xff]
  %v217 = vld [vmem:[%s3 + $0x8] sm:$0xff]
  %v218 = vld [vmem:[%s3 + $0x10] sm:$0xff]
  %v219 = vld [vmem:[%s3 + $0x18] sm:$0xff]
  %v220 = vld [vmem:[%s3 + $0x20] sm:$0xff]
  %v221 = vld [vmem:[%s3 + $0x28] sm:$0xff]
  %v222 = vld [vmem:[%s3 + $0x30] sm:$0xff]
  %v223 = vld [vmem:[%s3 + $0x38] sm:$0xff]
  %v224 = vld [vmem:[%s3 + $0x40] sm:$0xff]
  %v225 = vld [vmem:[%s3 + $0x48] sm:$0xff]
  %v226 = vld [vmem:[%s3 + $0x50] sm:$0xff]
  %v227 = vld [vmem:[%s3 + $0x58] sm:$0xff]
  %v228 = vld [vmem:[%s3 + $0x60] sm:$0xff]
  %v229 = vld [vmem:[%s3 + $0x68] sm:$0xff]
  %v230 = vld [vmem:[%s3 + $0x70] sm:$0xff]
  %v231 = vld [vmem:[%s3 + $0x78] sm:$0xff]
  %v232 = vld [vmem:[%s4] sm:$0x1]
  %v234 = vperm.slane %v232, 0
  %236 = vmatpush.msra.mxu0 %v231
  %237 = vmatpush.msra.mxu0 %v230
  %238 = vmatpush.msra.mxu0 %v229
  %239 = vmatpush.msra.mxu0 %v228
  %240 = vmatpush.msra.mxu0 %v227
  %241 = vmatpush.msra.mxu0 %v226
  %242 = vmatpush.msra.mxu0 %v225
  %243 = vmatpush.msra.mxu0 %v224
  %244 = vmatpush.msra.mxu0 %v223
  %245 = vmatpush.msra.mxu0 %v222
  %246 = vmatpush.msra.mxu0 %v221
  %247 = vmatpush.msra.mxu0 %v220
  %248 = vmatpush.msra.mxu0 %v219
  %249 = vmatpush.msra.mxu0 %v218
  %250 = vmatpush.msra.mxu0 %v217
  %251 = vmatpush.msra.mxu0 %v216
  %252 = vmatmul.f32.gmra.mxu0 %v215
  %v253 = vpop.f32.mrf.mxu0
  %v254 = vadd.f32 %v234, %v253
  %255 = vdwg.mxu0
  %v256 = vmax.f32 %v254, 0.0
  %v257 = vld [vmem:[%s5] sm:$0xff]
  %v258 = vld [vmem:[%s5 + $0x8] sm:$0xff]
  %v259 = vld [vmem:[%s5 + $0x10] sm:$0xff]
  %v260 = vld [vmem:[%s5 + $0x18] sm:$0xff]
  %v261 = vld [vmem:[%s5 + $0x20] sm:$0xff]
  %v262 = vld [vmem:[%s5 + $0x28] sm:$0xff]
  %v263 = vld [vmem:[%s5 + $0x30] sm:$0xff]
  %v264 = vld [vmem:[%s5 + $0x38] sm:$0xff]
  %v265 = vld [vmem:[%s5 + $0x40] sm:$0xff]
  %v266 = vld [vmem:[%s5 + $0x48] sm:$0xff]
  %v267 = vld [vmem:[%s5 + $0x50] sm:$0xff]
  %v268 = vld [vmem:[%s5 + $0x58] sm:$0xff]
  %v269 = vld [vmem:[%s5 + $0x60] sm:$0xff]
  %v270 = vld [vmem:[%s5 + $0x68] sm:$0xff]
  %v271 = vld [vmem:[%s5 + $0x70] sm:$0xff]
  %v272 = vld [vmem:[%s5 + $0x78] sm:$0xff]
  %v273 = vld [vmem:[%s6] sm:$0x1]
  %v275 = vperm.slane %v273, 0
  %277 = vmatpush.msra.mxu0 %v272
  %278 = vmatpush.msra.mxu0 %v271
  %279 = vmatpush.msra.mxu0 %v270
  %280 = vmatpush.msra.mxu0 %v269
  %281 = vmatpush.msra.mxu0 %v268
  %282 = vmatpush.msra.mxu0 %v267
  %283 = vmatpush.msra.mxu0 %v266
  %284 = vmatpush.msra.mxu0 %v265
  %285 = vmatpush.msra.mxu0 %v264
  %286 = vmatpush.msra.mxu0 %v263
  %287 = vmatpush.msra.mxu0 %v262
  %288 = vmatpush.msra.mxu0 %v261
  %289 = vmatpush.msra.mxu0 %v260
  %290 = vmatpush.msra.mxu0 %v259
  %291 = vmatpush.msra.mxu0 %v258
  %292 = vmatpush.msra.mxu0 %v257
  %293 = vmatmul.f32.gmra.mxu0 %v256
  %v294 = vpop.f32.mrf.mxu0
  %v295 = vadd.f32 %v275, %v294
  %296 = vdwg.mxu0
  %297 = vst [vmem:[%s7] sm:$0xff] %v295
  // Predicated region
  $region30: #{classic_model_forward.5} parent=0 // pred_check
    _
  $region31: #{classic_model_forward.5} parent=0 // pred_check_branch
    %299 = sbr.rel (0) target = $region33
  $region32: #{classic_model_forward.5} parent=0 // pred_region
    _
  $region33: #{classic_model_forward.5} parent=0 // pred_fallthru
    _
  // Predicated region
  $region34: #{classic_model_forward.5} parent=0 // pred_check
    _
  $region35: #{classic_model_forward.5} parent=0 // pred_check_branch
    %301 = sbr.rel (0) target = $region37
  $region36: #{classic_model_forward.5} parent=0 // pred_region
    _
  $region37: #{classic_model_forward.5} parent=0 // pred_fallthru
    _

</llo_original>
